<compile_context>
chip_gen: v5e
topology: v5e:2x2
jax: 0.10.0
libtpu: 0.0.40
codegen_flags: <defaults>
</compile_context>

<pallas_src>
import functools

import jax
import jax.numpy as jnp
from jax import lax
from jax.experimental import pallas as pl
from jax.experimental.pallas import tpu as pltpu


# ------------------------------------------------------------------ helpers ----

def _round_up(x, m):
    return ((x + m - 1) // m) * m


def _pick_tile(n, candidates):
    """Largest candidate that divides n, else n itself."""
    for t in candidates:
        if n % t == 0:
            return t
    return n


def _const_spec(shape, single_buffer):
    """BlockSpec for grid-invariant operands (weights / biases)."""
    index_map = lambda *_: (0,) * len(shape)
    if single_buffer:
        # Constant index_map -> one VMEM buffer is enough; halves weight VMEM.
        return pl.BlockSpec(shape, index_map, pipeline_mode=pl.Buffered(1))
    return pl.BlockSpec(shape, index_map)


def _physical_vmem_bytes():
    try:
        return int(pltpu.get_tpu_info().vmem_capacity_bytes)
    except Exception:
        return 64 << 20          # conservative fallback (v7x per-TC VMEM)


def _vmem_limit_bytes(entries):
    """entries: (block_shape, dtype, n_buffers). Resident bytes + one fixed
    margin, capped at 3/4 of physical VMEM (generation-aware)."""
    total = 0
    for shape, dtype, nbuf in entries:
        n = 1
        for s in shape:
            n *= int(s)
        total += n * jnp.dtype(dtype).itemsize * nbuf
    total += 8 << 20             # compiler scratch / relayout margin (single hedge)
    cap = (_physical_vmem_bytes() * 3) // 4
    return int(min(max(total, 16 << 20), cap))


# ------------------------------------------------------------------ kernels ----

def qkv_proj_kernel(x_ref, wqkv_ref, bqkv_ref, q_ref, k_ref, v_ref, *, scale):
    # One wide matmul: (TM, D) @ (D, 3D), f32 accumulate, bias add in f32.
    x = x_ref[...]
    d = x.shape[-1]
    y = (jnp.dot(x, wqkv_ref[...], preferred_element_type=jnp.float32)
         + bqkv_ref[...])                                   # (TM, 3D) f32
    # Fold the softmax scale into q here (once per element of q, in f32).
    q_ref[...] = (y[:, :d] * scale).astype(q_ref.dtype)
    k_ref[...] = y[:, d:2 * d].astype(k_ref.dtype)
    v_ref[...] = y[:, 2 * d:].astype(v_ref.dtype)


def attention_kernel(q_ref, k_ref, v_ref, wo_ref, bo_ref, o_ref, hacc_ref, *,
                     heads, n_valid, approx_recip):
    q = q_ref[0]                                  # (TQ, D), pre-scaled
    k = k_ref[0]                                  # (N_pad, D) full keys (this batch)
    v = v_ref[0]                                  # (N_pad, D) full values
    d = q.shape[-1]
    dh = d // heads
    n_pad = k.shape[0]
    cdt = q.dtype

    for h in range(heads):                        # static unroll; one head live at a time
        qh = q[:, h * dh:(h + 1) * dh]
        kh = k[:, h * dh:(h + 1) * dh]
        vh = v[:, h * dh:(h + 1) * dh]

        # q @ k^T without a transpose: contract dim 1 of both operands.
        dots = lax.dot_general(qh, kh, (((1,), (1,)), ((), ())),
                               preferred_element_type=jnp.float32)   # (TQ, N_pad) f32
        if n_pad > n_valid:
            key_idx = lax.broadcasted_iota(jnp.int32, dots.shape, 1)
            dots = jnp.where(key_idx < n_valid, dots, -jnp.inf)      # mask padded keys

        m = jnp.max(dots, axis=-1, keepdims=True)
        e = jnp.exp(dots - m)
        denom = jnp.sum(e, axis=-1, keepdims=True)

        # PV matmul on unnormalized probabilities, then normalize the small
        # (TQ, dh) result (far less VALU work than scaling (TQ, N_pad)).
        oh = jnp.dot(e.astype(cdt), vh, preferred_element_type=jnp.float32)
        if approx_recip:
            oh = oh * pl.reciprocal(denom, approx=True)              # EUP slot
        else:
            oh = oh / denom

        # Concatenate heads into VMEM scratch (bounded live ranges, no concat).
        hacc_ref[:, h * dh:(h + 1) * dh] = oh.astype(hacc_ref.dtype)

    # ONE wide nn1 projection: (TQ, D) @ (D, D), f32 accumulate.
    out = (jnp.dot(hacc_ref[...], wo_ref[...], preferred_element_type=jnp.float32)
           + bo_ref[...])
    o_ref[0] = out.astype(o_ref.dtype)


# ------------------------------------------------------------------ wrappers ---

def qkv_projection(x2d, wqkv, bqkv, *, scale, compute_dtype, single_buffer_weights):
    BN, D = x2d.shape
    TM = _pick_tile(BN, (1024, 512, 256, 128))
    nbuf_w = 1 if single_buffer_weights else 2
    wspec = lambda shape: _const_spec(shape, single_buffer_weights)
    vmem = _vmem_limit_bytes([
        ((TM, D), compute_dtype, 2),             # x tile (double-buffered)
        ((TM, D), compute_dtype, 2 * 3),         # q / k / v output tiles
        ((TM, 3 * D), jnp.float32, 1),           # f32 matmul intermediate
        ((D, 3 * D), compute_dtype, nbuf_w),     # wqkv
        ((1, 3 * D), jnp.float32, nbuf_w),       # bqkv
    ])
    out_sds = jax.ShapeDtypeStruct((BN, D), compute_dtype)
    kernel = functools.partial(qkv_proj_kernel, scale=scale)
    return pl.pallas_call(
        kernel,
        out_shape=(out_sds, out_sds, out_sds),
        grid_spec=pltpu.PrefetchScalarGridSpec(
            num_scalar_prefetch=0,
            grid=(BN // TM,),
            in_specs=[pl.BlockSpec((TM, D), lambda i: (i, 0)),
                      wspec((D, 3 * D)), wspec((1, 3 * D))],
            out_specs=(pl.BlockSpec((TM, D), lambda i: (i, 0)),
                       pl.BlockSpec((TM, D), lambda i: (i, 0)),
                       pl.BlockSpec((TM, D), lambda i: (i, 0)))),
        compiler_params=pltpu.CompilerParams(
            dimension_semantics=("parallel",),
            vmem_limit_bytes=vmem),
    )(x2d, wqkv, bqkv)


def attention_apply(q, k, v, wo, bo, *, heads, n_valid, out_dtype, compute_dtype,
                    single_buffer_weights):
    B, N_pad, D = q.shape
    TQ = _pick_tile(N_pad, (512, 256, 128))
    approx = bool(jnp.dtype(compute_dtype) == jnp.dtype(jnp.bfloat16))
    kernel = functools.partial(attention_kernel, heads=heads, n_valid=n_valid,
                               approx_recip=approx)
    nbuf_w = 1 if single_buffer_weights else 2
    wspec = lambda shape: _const_spec(shape, single_buffer_weights)
    vmem = _vmem_limit_bytes([
        ((1, TQ, D), compute_dtype, 2),          # q tile
        ((1, N_pad, D), compute_dtype, 2 * 2),   # full k and v blocks
        ((1, TQ, D), out_dtype, 2),              # output tile
        ((D, D), compute_dtype, nbuf_w),         # wo
        ((1, D), jnp.float32, nbuf_w),           # bo
        ((TQ, D), compute_dtype, 1),             # head-concat scratch
        ((TQ, N_pad), jnp.float32, 2),           # one head's scores / exp
        ((TQ, D), jnp.float32, 1),               # projection accumulator
    ])
    return pl.pallas_call(
        kernel,
        out_shape=jax.ShapeDtypeStruct((B, N_pad, D), out_dtype),
        grid_spec=pltpu.PrefetchScalarGridSpec(
            num_scalar_prefetch=0,
            grid=(B, N_pad // TQ),
            in_specs=[pl.BlockSpec((1, TQ, D), lambda b, i: (b, i, 0)),
                      pl.BlockSpec((1, N_pad, D), lambda b, i: (b, 0, 0)),
                      pl.BlockSpec((1, N_pad, D), lambda b, i: (b, 0, 0)),
                      wspec((D, D)), wspec((1, D))],
            out_specs=pl.BlockSpec((1, TQ, D), lambda b, i: (b, i, 0)),
            scratch_shapes=[pltpu.VMEM((TQ, D), compute_dtype)]),
        compiler_params=pltpu.CompilerParams(
            dimension_semantics=("parallel", "parallel"),
            vmem_limit_bytes=vmem),
    )(q, k, v, wo, bo)


def attention_forward(x, params, heads, *, compute_dtype=jnp.bfloat16,
                      single_buffer_weights=True):
    """Forward pass of the PyTorch Attention module (mask=None, eval mode)."""
    B, N, D = x.shape
    assert D % heads == 0
    scale = float(D) ** -0.5          # full embed dim, exactly as in the PyTorch source
    cdt = jnp.dtype(compute_dtype)

    # Lane-aligned sequence padding (handles e.g. ViT N=197). Padded key
    # columns are masked in-kernel; padded query rows are sliced off below.
    N_pad = _round_up(N, 128)
    x_p = x if N_pad == N else jnp.pad(x, ((0, 0), (0, N_pad - N), (0, 0)))
    x2d = x_p.reshape(B * N_pad, D).astype(cdt)

    # Pre-cast MXU weight operands once; biases stay f32 for the f32 accumulate.
    wqkv = params["wqkv"].astype(cdt)
    bqkv = params["bqkv"].astype(jnp.float32)
    wo = params["wo"].astype(cdt)
    bo = params["bo"].astype(jnp.float32)

    q2d, k2d, v2d = qkv_projection(
        x2d, wqkv, bqkv, scale=scale, compute_dtype=cdt,
        single_buffer_weights=single_buffer_weights)
    q = q2d.reshape(B, N_pad, D)
    k = k2d.reshape(B, N_pad, D)
    v = v2d.reshape(B, N_pad, D)

    out_pad = attention_apply(
        q, k, v, wo, bo, heads=heads, n_valid=N, out_dtype=x.dtype,
        compute_dtype=cdt, single_buffer_weights=single_buffer_weights)
    return out_pad[:, :N, :]


# ------------------------------------------------------------- pure-JAX ref ----

def reference_attention(x, params, heads, compute_dtype=jnp.float32):
    """Pure-JAX reference of Attention.forward (mask=None, eval)."""
    B, N, D = x.shape
    dh = D // heads
    scale = float(D) ** -0.5
    cdt = jnp.dtype(compute_dtype)
    xc = x.astype(cdt)
    qkv = (jnp.dot(xc, params["wqkv"].astype(cdt),
                   preferred_element_type=jnp.float32) + params["bqkv"]).astype(cdt)
    q, k, v = qkv[..., :D], qkv[..., D:2 * D], qkv[..., 2 * D:]
    q = q.reshape(B, N, heads, dh).transpose(0, 2, 1, 3)
    k = k.reshape(B, N, heads, dh).transpose(0, 2, 1, 3)
    v = v.reshape(B, N, heads, dh).transpose(0, 2, 1, 3)
    dots = jnp.einsum("bhid,bhjd->bhij", q, k,
                      preferred_element_type=jnp.float32) * scale
    attn = jax.nn.softmax(dots, axis=-1).astype(cdt)
    out = jnp.einsum("bhij,bhjd->bhid", attn, v,
                     preferred_element_type=jnp.float32).astype(cdt)
    out = out.transpose(0, 2, 1, 3).reshape(B, N, D)
    out = jnp.dot(out, params["wo"].astype(cdt),
                  preferred_element_type=jnp.float32) + params["bo"]
    return out.astype(x.dtype)


# ----------------------------------------------------------------------- main --

if __name__ == "__main__":
    B, N, D, heads = 2, 8, 32, 4

    key = jax.random.PRNGKey(0)
    key, k1, k2, k3, k4, kx = jax.random.split(key, 6)
    params = dict(
        wqkv=0.1 * jax.random.normal(k1, (D, 3 * D), jnp.float32),
        bqkv=0.1 * jax.random.normal(k2, (1, 3 * D), jnp.float32),
        wo=0.1 * jax.random.normal(k3, (D, D), jnp.float32),
        bo=0.1 * jax.random.normal(k4, (1, D), jnp.float32),
    )
    x = jax.random.normal(kx, (B, N, D), jnp.float32)

    # bf16 MXU operands (default); fall back to default double-buffered weights
    # if pipeline_mode=pl.Buffered(1) is unsupported by this jax version.
    single_buffer = True
    try:
        out_bf16 = jax.block_until_ready(
            attention_forward(x, params, heads, compute_dtype=jnp.bfloat16,
                              single_buffer_weights=True))
    except Exception:
        single_buffer = False
        out_bf16 = jax.block_until_ready(
            attention_forward(x, params, heads, compute_dtype=jnp.bfloat16,
                              single_buffer_weights=False))

    # Full-f32 path for tight numerical validation (exact division path).
    out_f32 = jax.block_until_ready(
        attention_forward(x, params, heads, compute_dtype=jnp.float32,
                          single_buffer_weights=single_buffer))

    ref_f32 = reference_attention(x, params, heads, compute_dtype=jnp.float32)
    ref_bf16 = reference_attention(x, params, heads, compute_dtype=jnp.bfloat16)

    assert out_f32.shape == (B, N, D) and out_bf16.shape == (B, N, D)
    err_f32 = float(jnp.max(jnp.abs(out_f32 - ref_f32)))
    assert jnp.allclose(out_f32, ref_f32, atol=1e-3, rtol=1e-3), \
        f"f32 max abs err {err_f32}"
    err_bf16 = float(jnp.max(jnp.abs(out_bf16 - ref_bf16)))
    assert jnp.allclose(out_bf16, ref_bf16, atol=1e-2, rtol=1e-2), \
        f"bf16 max abs err {err_bf16}"

    print("KERNEL_OK")
</pallas_src>

<mosaic_0001>
module attributes {stable_mosaic.version = 11 : i64} {
  func.func @qkv_proj_kernel(%arg0: i32, %arg1: memref<256x32xbf16, #tpu.memory_space<vmem>>, %arg2: memref<32x96xbf16, #tpu.memory_space<vmem>>, %arg3: memref<1x96xf32, #tpu.memory_space<vmem>>, %arg4: memref<256x32xbf16, #tpu.memory_space<vmem>>, %arg5: memref<256x32xbf16, #tpu.memory_space<vmem>>, %arg6: memref<256x32xbf16, #tpu.memory_space<vmem>>) attributes {dimension_semantics = [#tpu.dimension_semantics<parallel>], iteration_bounds = array<i64: 1>, scalar_prefetch = 0 : i64, scratch_operands = 0 : i64, tpu.core_type = #tpu.core_type<tc>, window_params = [{transform_indices = @transform_0, window_bounds = array<i64: 256, 32>}, {pipeline_mode = #tpu.pipeline_mode<synchronous>, transform_indices = @transform_1, window_bounds = array<i64: 32, 96>}, {pipeline_mode = #tpu.pipeline_mode<synchronous>, transform_indices = @transform_2, window_bounds = array<i64: 1, 96>}, {transform_indices = @transform_3, window_bounds = array<i64: 256, 32>}, {transform_indices = @transform_4, window_bounds = array<i64: 256, 32>}, {transform_indices = @transform_5, window_bounds = array<i64: 256, 32>}]} {
    %c0 = arith.constant 0 : index
    %c0_0 = arith.constant 0 : index
    %0 = vector.load %arg1[%c0, %c0_0] : memref<256x32xbf16, #tpu.memory_space<vmem>>, vector<256x32xbf16>
    %c0_1 = arith.constant 0 : index
    %c0_2 = arith.constant 0 : index
    %1 = vector.load %arg2[%c0_1, %c0_2] : memref<32x96xbf16, #tpu.memory_space<vmem>>, vector<32x96xbf16>
    %cst = arith.constant dense<0.000000e+00> : vector<256x96xf32>
    %2 = tpu.matmul %0, %1, %cst {dimension_numbers = #tpu.dot_dimension_numbers<[1], [0], [0], [1], [0, 0, 1, 1], [], []>} : vector<256x32xbf16>, vector<32x96xbf16>, vector<256x96xf32> -> vector<256x96xf32>
    %c0_3 = arith.constant 0 : index
    %c0_4 = arith.constant 0 : index
    %3 = vector.load %arg3[%c0_3, %c0_4] : memref<1x96xf32, #tpu.memory_space<vmem>>, vector<1x96xf32>
    %4 = vector.broadcast %3 : vector<1x96xf32> to vector<256x96xf32>
    %5 = arith.addf %2, %4 : vector<256x96xf32>
    %6 = vector.extract_strided_slice %5 {offsets = [0, 0], sizes = [256, 32], strides = [1, 1]} : vector<256x96xf32> to vector<256x32xf32>
    %cst_5 = arith.constant 0.176776692 : f32
    %7 = vector.broadcast %cst_5 : f32 to vector<256x32xf32>
    %8 = arith.mulf %6, %7 : vector<256x32xf32>
    %9 = arith.truncf %8 : vector<256x32xf32> to vector<256x32xbf16>
    %c0_6 = arith.constant 0 : index
    %c0_7 = arith.constant 0 : index
    %10 = vector.load %arg4[%c0_6, %c0_7] : memref<256x32xbf16, #tpu.memory_space<vmem>>, vector<256x32xbf16>
    tpu.vector_store %arg4[%c0_6, %c0_7], %9 {strides = array<i32>} : memref<256x32xbf16, #tpu.memory_space<vmem>>, vector<256x32xbf16>,
    %11 = vector.extract_strided_slice %5 {offsets = [0, 32], sizes = [256, 32], strides = [1, 1]} : vector<256x96xf32> to vector<256x32xf32>
    %12 = arith.truncf %11 : vector<256x32xf32> to vector<256x32xbf16>
    %c0_8 = arith.constant 0 : index
    %c0_9 = arith.constant 0 : index
    %13 = vector.load %arg5[%c0_8, %c0_9] : memref<256x32xbf16, #tpu.memory_space<vmem>>, vector<256x32xbf16>
    tpu.vector_store %arg5[%c0_8, %c0_9], %12 {strides = array<i32>} : memref<256x32xbf16, #tpu.memory_space<vmem>>, vector<256x32xbf16>,
    %14 = vector.extract_strided_slice %5 {offsets = [0, 64], sizes = [256, 32], strides = [1, 1]} : vector<256x96xf32> to vector<256x32xf32>
    %15 = arith.truncf %14 : vector<256x32xf32> to vector<256x32xbf16>
    %c0_10 = arith.constant 0 : index
    %c0_11 = arith.constant 0 : index
    %16 = vector.load %arg6[%c0_10, %c0_11] : memref<256x32xbf16, #tpu.memory_space<vmem>>, vector<256x32xbf16>
    tpu.vector_store %arg6[%c0_10, %c0_11], %15 {strides = array<i32>} : memref<256x32xbf16, #tpu.memory_space<vmem>>, vector<256x32xbf16>,
    return
  }
  func.func @transform_0(%arg0: i32) -> (i32, i32) {
    %c0_i32 = arith.constant 0 : i32
    %c0_i32_0 = arith.constant 0 : i32
    return %arg0, %c0_i32 : i32, i32
  }
  func.func @transform_1(%arg0: i32) -> (i32, i32) {
    %c0_i32 = arith.constant 0 : i32
    %c0_i32_0 = arith.constant 0 : i32
    %c0_i32_1 = arith.constant 0 : i32
    return %c0_i32, %c0_i32_0 : i32, i32
  }
  func.func @transform_2(%arg0: i32) -> (i32, i32) {
    %c0_i32 = arith.constant 0 : i32
    %c0_i32_0 = arith.constant 0 : i32
    %c0_i32_1 = arith.constant 0 : i32
    return %c0_i32, %c0_i32_0 : i32, i32
  }
  func.func @transform_3(%arg0: i32) -> (i32, i32) {
    %c0_i32 = arith.constant 0 : i32
    %c0_i32_0 = arith.constant 0 : i32
    return %arg0, %c0_i32 : i32, i32
  }
  func.func @transform_4(%arg0: i32) -> (i32, i32) {
    %c0_i32 = arith.constant 0 : i32
    %c0_i32_0 = arith.constant 0 : i32
    return %arg0, %c0_i32 : i32, i32
  }
  func.func @transform_5(%arg0: i32) -> (i32, i32) {
    %c0_i32 = arith.constant 0 : i32
    %c0_i32_0 = arith.constant 0 : i32
    return %arg0, %c0_i32 : i32, i32
  }
}

module attributes {stable_mosaic.version = 11 : i64} {
  func.func @qkv_proj_kernel(%arg0: i32, %arg1: memref<256x32xbf16, #tpu.memory_space<vmem>>, %arg2: memref<32x96xbf16, #tpu.memory_space<vmem>>, %arg3: memref<1x96xf32, #tpu.memory_space<vmem>>, %arg4: memref<256x32xbf16, #tpu.memory_space<vmem>>, %arg5: memref<256x32xbf16, #tpu.memory_space<vmem>>, %arg6: memref<256x32xbf16, #tpu.memory_space<vmem>>) attributes {dimension_semantics = [#tpu.dimension_semantics<parallel>], iteration_bounds = array<i64: 1>, scalar_prefetch = 0 : i64, scratch_operands = 0 : i64, tpu.core_type = #tpu.core_type<tc>, window_params = [{transform_indices = @transform_0, window_bounds = array<i64: 256, 32>}, {pipeline_mode = #tpu.pipeline_mode<synchronous>, transform_indices = @transform_1, window_bounds = array<i64: 32, 96>}, {pipeline_mode = #tpu.pipeline_mode<synchronous>, transform_indices = @transform_2, window_bounds = array<i64: 1, 96>}, {transform_indices = @transform_3, window_bounds = array<i64: 256, 32>}, {transform_indices = @transform_4, window_bounds = array<i64: 256, 32>}, {transform_indices = @transform_5, window_bounds = array<i64: 256, 32>}]} {
    %c0 = arith.constant 0 : index
    %c0_0 = arith.constant 0 : index
    %0 = vector.load %arg1[%c0, %c0_0] : memref<256x32xbf16, #tpu.memory_space<vmem>>, vector<256x32xbf16>
    %c0_1 = arith.constant 0 : index
    %c0_2 = arith.constant 0 : index
    %1 = vector.load %arg2[%c0_1, %c0_2] : memref<32x96xbf16, #tpu.memory_space<vmem>>, vector<32x96xbf16>
    %cst = arith.constant dense<0.000000e+00> : vector<256x96xf32>
    %2 = tpu.matmul %0, %1, %cst {dimension_numbers = #tpu.dot_dimension_numbers<[1], [0], [0], [1], [0, 0, 1, 1], [], []>} : vector<256x32xbf16>, vector<32x96xbf16>, vector<256x96xf32> -> vector<256x96xf32>
    %c0_3 = arith.constant 0 : index
    %c0_4 = arith.constant 0 : index
    %3 = vector.load %arg3[%c0_3, %c0_4] : memref<1x96xf32, #tpu.memory_space<vmem>>, vector<1x96xf32>
    %4 = vector.broadcast %3 : vector<1x96xf32> to vector<256x96xf32>
    %5 = arith.addf %2, %4 : vector<256x96xf32>
    %6 = vector.extract_strided_slice %5 {offsets = [0, 0], sizes = [256, 32], strides = [1, 1]} : vector<256x96xf32> to vector<256x32xf32>
    %cst_5 = arith.constant 0.176776692 : f32
    %7 = vector.broadcast %cst_5 : f32 to vector<256x32xf32>
    %8 = arith.mulf %6, %7 : vector<256x32xf32>
    %9 = arith.truncf %8 : vector<256x32xf32> to vector<256x32xbf16>
    %c0_6 = arith.constant 0 : index
    %c0_7 = arith.constant 0 : index
    %10 = vector.load %arg4[%c0_6, %c0_7] : memref<256x32xbf16, #tpu.memory_space<vmem>>, vector<256x32xbf16>
    tpu.vector_store %arg4[%c0_6, %c0_7], %9 {strides = array<i32>} : memref<256x32xbf16, #tpu.memory_space<vmem>>, vector<256x32xbf16>,
    %11 = vector.extract_strided_slice %5 {offsets = [0, 32], sizes = [256, 32], strides = [1, 1]} : vector<256x96xf32> to vector<256x32xf32>
    %12 = arith.truncf %11 : vector<256x32xf32> to vector<256x32xbf16>
    %c0_8 = arith.constant 0 : index
    %c0_9 = arith.constant 0 : index
    %13 = vector.load %arg5[%c0_8, %c0_9] : memref<256x32xbf16, #tpu.memory_space<vmem>>, vector<256x32xbf16>
    tpu.vector_store %arg5[%c0_8, %c0_9], %12 {strides = array<i32>} : memref<256x32xbf16, #tpu.memory_space<vmem>>, vector<256x32xbf16>,
    %14 = vector.extract_strided_slice %5 {offsets = [0, 64], sizes = [256, 32], strides = [1, 1]} : vector<256x96xf32> to vector<256x32xf32>
    %15 = arith.truncf %14 : vector<256x32xf32> to vector<256x32xbf16>
    %c0_10 = arith.constant 0 : index
    %c0_11 = arith.constant 0 : index
    %16 = vector.load %arg6[%c0_10, %c0_11] : memref<256x32xbf16, #tpu.memory_space<vmem>>, vector<256x32xbf16>
    tpu.vector_store %arg6[%c0_10, %c0_11], %15 {strides = array<i32>} : memref<256x32xbf16, #tpu.memory_space<vmem>>, vector<256x32xbf16>,
    return
  }
  func.func @transform_0(%arg0: i32) -> (i32, i32) {
    %c0_i32 = arith.constant 0 : i32
    %c0_i32_0 = arith.constant 0 : i32
    return %arg0, %c0_i32 : i32, i32
  }
  func.func @transform_1(%arg0: i32) -> (i32, i32) {
    %c0_i32 = arith.constant 0 : i32
    %c0_i32_0 = arith.constant 0 : i32
    %c0_i32_1 = arith.constant 0 : i32
    return %c0_i32, %c0_i32_0 : i32, i32
  }
  func.func @transform_2(%arg0: i32) -> (i32, i32) {
    %c0_i32 = arith.constant 0 : i32
    %c0_i32_0 = arith.constant 0 : i32
    %c0_i32_1 = arith.constant 0 : i32
    return %c0_i32, %c0_i32_0 : i32, i32
  }
  func.func @transform_3(%arg0: i32) -> (i32, i32) {
    %c0_i32 = arith.constant 0 : i32
    %c0_i32_0 = arith.constant 0 : i32
    return %arg0, %c0_i32 : i32, i32
  }
  func.func @transform_4(%arg0: i32) -> (i32, i32) {
    %c0_i32 = arith.constant 0 : i32
    %c0_i32_0 = arith.constant 0 : i32
    return %arg0, %c0_i32 : i32, i32
  }
  func.func @transform_5(%arg0: i32) -> (i32, i32) {
    %c0_i32 = arith.constant 0 : i32
    %c0_i32_0 = arith.constant 0 : i32
    return %arg0, %c0_i32 : i32, i32
  }
}

</mosaic_0001>

<llo_original>
// kernel: tpu_custom_call.1
$region0: #{tpu_custom_call.1}
  #allocation0 [shape = 'u32[]', space=smem, size = 0x4, offset = 0x4, fixed_abs, tag = 'smem constant byte address 0x4 - core index']
  #allocation1 [shape = 'u32[72,128]{1,0:T(1,128)}', space=vmem, size = 0x9000, scoped, tag = 'internal scratch']
  %s0 = inlined_call_operand.vmem [shape: bf16[256,32], index: 0, kind: input, shape index: {}]
  %s1 = inlined_call_operand.vmem [shape: bf16[32,96], index: 1, kind: input, shape index: {}]
  %s2 = inlined_call_operand.vmem [shape: f32[1,96], index: 2, kind: input, shape index: {}]
  %s3 = inlined_call_operand.vmem [shape: bf16[256,32], index: 3, kind: output, shape index: {0}]
  %s4 = inlined_call_operand.vmem [shape: bf16[256,32], index: 4, kind: output, shape index: {1}]
  %s5 = inlined_call_operand.vmem [shape: bf16[256,32], index: 5, kind: output, shape index: {2}]
  %6 = xla_tuple %s3, %s4, %s5
  %s7 = sld [smem:[#allocation0]]
  $region38: #{tpu_custom_call.1} parent=0
    _
  %s9 = ssub.s32 1, %s7
  %s10 = scalar_select 0, %s9, %s7
  // Predicated region
  $region2: #{tpu_custom_call.1} parent=0 // pred_check
    _
  $region3: #{tpu_custom_call.1} parent=0 // pred_check_branch
    %12 = sbr.rel (0) target = $region5
  $region4: #{tpu_custom_call.1} parent=0 // pred_region
    _
  $region5: #{tpu_custom_call.1} parent=0 // pred_fallthru
    _
  // Predicated region
  $region6: #{tpu_custom_call.1} parent=0 // pred_check
    _
  $region7: #{tpu_custom_call.1} parent=0 // pred_check_branch
    %14 = sbr.rel (0) target = $region9
  $region8: #{tpu_custom_call.1} parent=0 // pred_region
    _
  $region9: #{tpu_custom_call.1} parent=0 // pred_fallthru
    _
  // Predicated region
  $region10: #{tpu_custom_call.1} parent=0 // pred_check
    _
  $region11: #{tpu_custom_call.1} parent=0 // pred_check_branch
    %16 = sbr.rel (0) target = $region13
  $region12: #{tpu_custom_call.1} parent=0 // pred_region
    _
  $region13: #{tpu_custom_call.1} parent=0 // pred_fallthru
    _
  %v18 = vld [vmem:[%s0] sm:$0xf]
  %v19 = vld [vmem:[%s0 + $0x4] sm:$0xf]
  %v20 = vld [vmem:[%s0 + $0x8] sm:$0xf]
  %v21 = vld [vmem:[%s0 + $0xc] sm:$0xf]
  %v22 = vld [vmem:[%s0 + $0x10] sm:$0xf]
  %v23 = vld [vmem:[%s0 + $0x14] sm:$0xf]
  %v24 = vld [vmem:[%s0 + $0x18] sm:$0xf]
  %v25 = vld [vmem:[%s0 + $0x1c] sm:$0xf]
  %v26 = vld [vmem:[%s0 + $0x20] sm:$0xf]
  %v27 = vld [vmem:[%s0 + $0x24] sm:$0xf]
  %v28 = vld [vmem:[%s0 + $0x28] sm:$0xf]
  %v29 = vld [vmem:[%s0 + $0x2c] sm:$0xf]
  %v30 = vld [vmem:[%s0 + $0x30] sm:$0xf]
  %v31 = vld [vmem:[%s0 + $0x34] sm:$0xf]
  %v32 = vld [vmem:[%s0 + $0x38] sm:$0xf]
  %v33 = vld [vmem:[%s0 + $0x3c] sm:$0xf]
  %v34 = vld [vmem:[%s0 + $0x40] sm:$0xf]
  %v35 = vld [vmem:[%s0 + $0x44] sm:$0xf]
  %v36 = vld [vmem:[%s0 + $0x48] sm:$0xf]
  %v37 = vld [vmem:[%s0 + $0x4c] sm:$0xf]
  %v38 = vld [vmem:[%s0 + $0x50] sm:$0xf]
  %v39 = vld [vmem:[%s0 + $0x54] sm:$0xf]
  %v40 = vld [vmem:[%s0 + $0x58] sm:$0xf]
  %v41 = vld [vmem:[%s0 + $0x5c] sm:$0xf]
  %v42 = vld [vmem:[%s0 + $0x60] sm:$0xf]
  %v43 = vld [vmem:[%s0 + $0x64] sm:$0xf]
  %v44 = vld [vmem:[%s0 + $0x68] sm:$0xf]
  %v45 = vld [vmem:[%s0 + $0x6c] sm:$0xf]
  %v46 = vld [vmem:[%s0 + $0x70] sm:$0xf]
  %v47 = vld [vmem:[%s0 + $0x74] sm:$0xf]
  %v48 = vld [vmem:[%s0 + $0x78] sm:$0xf]
  %v49 = vld [vmem:[%s0 + $0x7c] sm:$0xf]
  %v50 = vld [vmem:[%s1] sm:$0xf]
  %v51 = vld [vmem:[%s1 + $0x4] sm:$0xf]
  %v52 = vld [vmem:[%s1 + $0x8] sm:$0xf]
  %v53 = vld [vmem:[%s1 + $0xc] sm:$0xf]
  %v54 = vld [vmem:[%s2] sm:$0x1]
  %v56 = vperm.slane %v54, 0
  %v90 = vunpack.c.l.b16 %v18
  %v91 = vunpack.c.l.b16 %v19
  %v92 = vunpack.c.l.b16 %v20
  %v93 = vunpack.c.l.b16 %v21
  %v94 = vunpack.c.l.b16 %v22
  %v95 = vunpack.c.l.b16 %v23
  %v96 = vunpack.c.l.b16 %v24
  %v97 = vunpack.c.l.b16 %v25
  %v98 = vunpack.c.l.b16 %v26
  %v99 = vunpack.c.l.b16 %v27
  %v100 = vunpack.c.l.b16 %v28
  %v101 = vunpack.c.l.b16 %v29
  %v102 = vunpack.c.l.b16 %v30
  %v103 = vunpack.c.l.b16 %v31
  %v104 = vunpack.c.l.b16 %v32
  %v105 = vunpack.c.l.b16 %v33
  %v106 = vunpack.c.l.b16 %v34
  %v107 = vunpack.c.l.b16 %v35
  %v108 = vunpack.c.l.b16 %v36
  %v109 = vunpack.c.l.b16 %v37
  %v110 = vunpack.c.l.b16 %v38
  %v111 = vunpack.c.l.b16 %v39
  %v112 = vunpack.c.l.b16 %v40
  %v113 = vunpack.c.l.b16 %v41
  %v114 = vunpack.c.l.b16 %v42
  %v115 = vunpack.c.l.b16 %v43
  %v116 = vunpack.c.l.b16 %v44
  %v117 = vunpack.c.l.b16 %v45
  %v118 = vunpack.c.l.b16 %v46
  %v119 = vunpack.c.l.b16 %v47
  %v120 = vunpack.c.l.b16 %v48
  %v121 = vunpack.c.l.b16 %v49
  %v122 = vpack.c.b16 %v91, %v90
  %v123 = vpack.c.b16 %v93, %v92
  %v124 = vpack.c.b16 %v95, %v94
  %v125 = vpack.c.b16 %v97, %v96
  %v126 = vpack.c.b16 %v99, %v98
  %v127 = vpack.c.b16 %v101, %v100
  %v128 = vpack.c.b16 %v103, %v102
  %v129 = vpack.c.b16 %v105, %v104
  %v130 = vpack.c.b16 %v107, %v106
  %v131 = vpack.c.b16 %v109, %v108
  %v132 = vpack.c.b16 %v111, %v110
  %v133 = vpack.c.b16 %v113, %v112
  %v134 = vpack.c.b16 %v115, %v114
  %v135 = vpack.c.b16 %v117, %v116
  %v136 = vpack.c.b16 %v119, %v118
  %v137 = vpack.c.b16 %v121, %v120
  %v142 = vunpack.c.l.b16 %v50
  %v143 = vunpack.c.l.b16 %v51
  %v144 = vunpack.c.l.b16 %v52
  %v145 = vunpack.c.l.b16 %v53
  %v146 = vpack.c.b16 %v143, %v142
  %v147 = vpack.c.b16 %v145, %v144
  %vm150 = vcmask 261120
  %v152 = vsel %vm150, %v122, 0
  %v155 = vsel %vm150, %v123, 0
  %v158 = vsel %vm150, %v124, 0
  %v161 = vsel %vm150, %v125, 0
  %v164 = vsel %vm150, %v126, 0
  %v167 = vsel %vm150, %v127, 0
  %v170 = vsel %vm150, %v128, 0
  %v173 = vsel %vm150, %v129, 0
  %v176 = vsel %vm150, %v130, 0
  %v179 = vsel %vm150, %v131, 0
  %v182 = vsel %vm150, %v132, 0
  %v185 = vsel %vm150, %v133, 0
  %v188 = vsel %vm150, %v134, 0
  %v191 = vsel %vm150, %v135, 0
  %v194 = vsel %vm150, %v136, 0
  %v197 = vsel %vm150, %v137, 0
  %199 = vmatpush.bf16.msra.mxu0 0
  %200 = vmatpush.bf16.msra.mxu0 0
  %201 = vmatpush.bf16.msra.mxu0 0
  %202 = vmatpush.bf16.msra.mxu0 0
  %203 = vmatpush.bf16.msra.mxu0 0
  %204 = vmatpush.bf16.msra.mxu0 0
  %205 = vmatpush.bf16.msra.mxu0 %v147
  %206 = vmatpush.bf16.msra.mxu0 %v146
  %207 = vmatmul.bf16.gmra.mxu0 %v152
  %v208 = vpop.f32.mrf.mxu0
  %v209 = vadd.f32 %v56, %v208
  %v210 = vpop.f32.mrf.mxu0
  %v211 = vadd.f32 %v56, %v210
  %212 = vmatmul.bf16.gmra.mxu0 %v155
  %v213 = vpop.f32.mrf.mxu0
  %v214 = vadd.f32 %v56, %v213
  %v215 = vpop.f32.mrf.mxu0
  %v216 = vadd.f32 %v56, %v215
  %217 = vmatmul.bf16.gmra.mxu0 %v158
  %v218 = vpop.f32.mrf.mxu0
  %v219 = vadd.f32 %v56, %v218
  %v220 = vpop.f32.mrf.mxu0
  %v221 = vadd.f32 %v56, %v220
  %222 = vmatmul.bf16.gmra.mxu0 %v161
  %v223 = vpop.f32.mrf.mxu0
  %v224 = vadd.f32 %v56, %v223
  %v225 = vpop.f32.mrf.mxu0
  %v226 = vadd.f32 %v56, %v225
  %227 = vmatmul.bf16.gmra.mxu0 %v164
  %v228 = vpop.f32.mrf.mxu0
  %v229 = vadd.f32 %v56, %v228
  %v230 = vpop.f32.mrf.mxu0
  %v231 = vadd.f32 %v56, %v230
  %232 = vmatmul.bf16.gmra.mxu0 %v167
  %v233 = vpop.f32.mrf.mxu0
  %v234 = vadd.f32 %v56, %v233
  %v235 = vpop.f32.mrf.mxu0
  %v236 = vadd.f32 %v56, %v235
  %237 = vmatmul.bf16.gmra.mxu0 %v170
  %v238 = vpop.f32.mrf.mxu0
  %v239 = vadd.f32 %v56, %v238
  %v240 = vpop.f32.mrf.mxu0
  %v241 = vadd.f32 %v56, %v240
  %242 = vmatmul.bf16.gmra.mxu0 %v173
  %v243 = vpop.f32.mrf.mxu0
  %v244 = vadd.f32 %v56, %v243
  %v245 = vpop.f32.mrf.mxu0
  %v246 = vadd.f32 %v56, %v245
  %247 = vmatmul.bf16.gmra.mxu0 %v176
  %v248 = vpop.f32.mrf.mxu0
  %v249 = vadd.f32 %v56, %v248
  %v250 = vpop.f32.mrf.mxu0
  %v251 = vadd.f32 %v56, %v250
  %252 = vmatmul.bf16.gmra.mxu0 %v179
  %v253 = vpop.f32.mrf.mxu0
  %v254 = vadd.f32 %v56, %v253
  %v255 = vpop.f32.mrf.mxu0
  %v256 = vadd.f32 %v56, %v255
  %257 = vmatmul.bf16.gmra.mxu0 %v182
  %v258 = vpop.f32.mrf.mxu0
  %v259 = vadd.f32 %v56, %v258
  %v260 = vpop.f32.mrf.mxu0
  %v261 = vadd.f32 %v56, %v260
  %262 = vmatmul.bf16.gmra.mxu0 %v185
  %v263 = vpop.f32.mrf.mxu0
  %v264 = vadd.f32 %v56, %v263
  %v265 = vpop.f32.mrf.mxu0
  %v266 = vadd.f32 %v56, %v265
  %267 = vmatmul.bf16.gmra.mxu0 %v188
  %v268 = vpop.f32.mrf.mxu0
  %v269 = vadd.f32 %v56, %v268
  %v270 = vpop.f32.mrf.mxu0
  %v271 = vadd.f32 %v56, %v270
  %272 = vmatmul.bf16.gmra.mxu0 %v191
  %v273 = vpop.f32.mrf.mxu0
  %v274 = vadd.f32 %v56, %v273
  %v275 = vpop.f32.mrf.mxu0
  %v276 = vadd.f32 %v56, %v275
  %277 = vmatmul.bf16.gmra.mxu0 %v194
  %v278 = vpop.f32.mrf.mxu0
  %v279 = vadd.f32 %v56, %v278
  %v280 = vpop.f32.mrf.mxu0
  %v281 = vadd.f32 %v56, %v280
  %282 = vmatmul.bf16.gmra.mxu0 %v197
  %v283 = vpop.f32.mrf.mxu0
  %v284 = vadd.f32 %v56, %v283
  %v285 = vpop.f32.mrf.mxu0
  %v286 = vadd.f32 %v56, %v285
  %287 = vdwg.mxu0
  %v288 = vmul.f32 %v209, 0.17677669
  %v289 = vmul.f32 %v211, 0.17677669
  %v290 = vmul.f32 %v214, 0.17677669
  %v291 = vmul.f32 %v216, 0.17677669
  %v292 = vmul.f32 %v219, 0.17677669
  %v293 = vmul.f32 %v221, 0.17677669
  %v294 = vmul.f32 %v224, 0.17677669
  %v295 = vmul.f32 %v226, 0.17677669
  %v296 = vmul.f32 %v229, 0.17677669
  %v297 = vmul.f32 %v231, 0.17677669
  %v298 = vmul.f32 %v234, 0.17677669
  %v299 = vmul.f32 %v236, 0.17677669
  %v300 = vmul.f32 %v239, 0.17677669
  %v301 = vmul.f32 %v241, 0.17677669
  %v302 = vmul.f32 %v244, 0.17677669
  %v303 = vmul.f32 %v246, 0.17677669
  %v304 = vmul.f32 %v249, 0.17677669
  %v305 = vmul.f32 %v251, 0.17677669
  %v306 = vmul.f32 %v254, 0.17677669
  %v307 = vmul.f32 %v256, 0.17677669
  %v308 = vmul.f32 %v259, 0.17677669
  %v309 = vmul.f32 %v261, 0.17677669
  %v310 = vmul.f32 %v264, 0.17677669
  %v311 = vmul.f32 %v266, 0.17677669
  %v312 = vmul.f32 %v269, 0.17677669
  %v313 = vmul.f32 %v271, 0.17677669
  %v314 = vmul.f32 %v274, 0.17677669
  %v315 = vmul.f32 %v276, 0.17677669
  %v316 = vmul.f32 %v279, 0.17677669
  %v317 = vmul.f32 %v281, 0.17677669
  %v318 = vmul.f32 %v284, 0.17677669
  %v319 = vmul.f32 %v286, 0.17677669
  %v320 = vpack.c.bf16 %v288, %v288
  %v321 = vpack.c.bf16 %v289, %v289
  %v322 = vpack.c.bf16 %v290, %v290
  %v323 = vpack.c.bf16 %v291, %v291
  %v324 = vpack.c.bf16 %v292, %v292
  %v325 = vpack.c.bf16 %v293, %v293
  %v326 = vpack.c.bf16 %v294, %v294
  %v327 = vpack.c.bf16 %v295, %v295
  %v328 = vpack.c.bf16 %v296, %v296
  %v329 = vpack.c.bf16 %v297, %v297
  %v330 = vpack.c.bf16 %v298, %v298
  %v331 = vpack.c.bf16 %v299, %v299
  %v332 = vpack.c.bf16 %v300, %v300
  %v333 = vpack.c.bf16 %v301, %v301
  %v334 = vpack.c.bf16 %v302, %v302
  %v335 = vpack.c.bf16 %v303, %v303
  %v336 = vpack.c.bf16 %v304, %v304
  %v337 = vpack.c.bf16 %v305, %v305
  %v338 = vpack.c.bf16 %v306, %v306
  %v339 = vpack.c.bf16 %v307, %v307
  %v340 = vpack.c.bf16 %v308, %v308
  %v341 = vpack.c.bf16 %v309, %v309
  %v342 = vpack.c.bf16 %v310, %v310
  %v343 = vpack.c.bf16 %v311, %v311
  %v344 = vpack.c.bf16 %v312, %v312
  %v345 = vpack.c.bf16 %v313, %v313
  %v346 = vpack.c.bf16 %v314, %v314
  %v347 = vpack.c.bf16 %v315, %v315
  %v348 = vpack.c.bf16 %v316, %v316
  %v349 = vpack.c.bf16 %v317, %v317
  %v350 = vpack.c.bf16 %v318, %v318
  %v351 = vpack.c.bf16 %v319, %v319
  %vm352 = vcmask 257024
  %353 = vst.msk [vmem:[%s3] sm:$0xf] %vm352, %v320
  %354 = vst.msk [vmem:[%s3 + $0x4] sm:$0xf] %vm352, %v321
  %355 = vst.msk [vmem:[%s3 + $0x8] sm:$0xf] %vm352, %v322
  %356 = vst.msk [vmem:[%s3 + $0xc] sm:$0xf] %vm352, %v323
  %357 = vst.msk [vmem:[%s3 + $0x10] sm:$0xf] %vm352, %v324
  %358 = vst.msk [vmem:[%s3 + $0x14] sm:$0xf] %vm352, %v325
  %359 = vst.msk [vmem:[%s3 + $0x18] sm:$0xf] %vm352, %v326
  %360 = vst.msk [vmem:[%s3 + $0x1c] sm:$0xf] %vm352, %v327
  %361 = vst.msk [vmem:[%s3 + $0x20] sm:$0xf] %vm352, %v328
  %362 = vst.msk [vmem:[%s3 + $0x24] sm:$0xf] %vm352, %v329
  %363 = vst.msk [vmem:[%s3 + $0x28] sm:$0xf] %vm352, %v330
  %364 = vst.msk [vmem:[%s3 + $0x2c] sm:$0xf] %vm352, %v331
  %365 = vst.msk [vmem:[%s3 + $0x30] sm:$0xf] %vm352, %v332
  %366 = vst.msk [vmem:[%s3 + $0x34] sm:$0xf] %vm352, %v333
  %367 = vst.msk [vmem:[%s3 + $0x38] sm:$0xf] %vm352, %v334
  %368 = vst.msk [vmem:[%s3 + $0x3c] sm:$0xf] %vm352, %v335
  %369 = vst.msk [vmem:[%s3 + $0x40] sm:$0xf] %vm352, %v336
  %370 = vst.msk [vmem:[%s3 + $0x44] sm:$0xf] %vm352, %v337
  %371 = vst.msk [vmem:[%s3 + $0x48] sm:$0xf] %vm352, %v338
  %372 = vst.msk [vmem:[%s3 + $0x4c] sm:$0xf] %vm352, %v339
  %373 = vst.msk [vmem:[%s3 + $0x50] sm:$0xf] %vm352, %v340
  %374 = vst.msk [vmem:[%s3 + $0x54] sm:$0xf] %vm352, %v341
  %375 = vst.msk [vmem:[%s3 + $0x58] sm:$0xf] %vm352, %v342
  %376 = vst.msk [vmem:[%s3 + $0x5c] sm:$0xf] %vm352, %v343
  %377 = vst.msk [vmem:[%s3 + $0x60] sm:$0xf] %vm352, %v344
  %378 = vst.msk [vmem:[%s3 + $0x64] sm:$0xf] %vm352, %v345
  %379 = vst.msk [vmem:[%s3 + $0x68] sm:$0xf] %vm352, %v346
  %380 = vst.msk [vmem:[%s3 + $0x6c] sm:$0xf] %vm352, %v347
  %381 = vst.msk [vmem:[%s3 + $0x70] sm:$0xf] %vm352, %v348
  %382 = vst.msk [vmem:[%s3 + $0x74] sm:$0xf] %vm352, %v349
  %383 = vst.msk [vmem:[%s3 + $0x78] sm:$0xf] %vm352, %v350
  %384 = vst.msk [vmem:[%s3 + $0x7c] sm:$0xf] %vm352, %v351
  %v385 = vpack.c.bf16 %v209, %v209
  %v386 = vpack.c.bf16 %v211, %v211
  %v387 = vpack.c.bf16 %v214, %v214
  %v388 = vpack.c.bf16 %v216, %v216
  %v389 = vpack.c.bf16 %v219, %v219
  %v390 = vpack.c.bf16 %v221, %v221
  %v391 = vpack.c.bf16 %v224, %v224
  %v392 = vpack.c.bf16 %v226, %v226
  %v393 = vpack.c.bf16 %v229, %v229
  %v394 = vpack.c.bf16 %v231, %v231
  %v395 = vpack.c.bf16 %v234, %v234
  %v396 = vpack.c.bf16 %v236, %v236
  %v397 = vpack.c.bf16 %v239, %v239
  %v398 = vpack.c.bf16 %v241, %v241
  %v399 = vpack.c.bf16 %v244, %v244
  %v400 = vpack.c.bf16 %v246, %v246
  %v401 = vpack.c.bf16 %v249, %v249
  %v402 = vpack.c.bf16 %v251, %v251
  %v403 = vpack.c.bf16 %v254, %v254
  %v404 = vpack.c.bf16 %v256, %v256
  %v405 = vpack.c.bf16 %v259, %v259
  %v406 = vpack.c.bf16 %v261, %v261
  %v407 = vpack.c.bf16 %v264, %v264
  %v408 = vpack.c.bf16 %v266, %v266
  %v409 = vpack.c.bf16 %v269, %v269
  %v410 = vpack.c.bf16 %v271, %v271
  %v411 = vpack.c.bf16 %v274, %v274
  %v412 = vpack.c.bf16 %v276, %v276
  %v413 = vpack.c.bf16 %v279, %v279
  %v414 = vpack.c.bf16 %v281, %v281
  %v415 = vpack.c.bf16 %v284, %v284
  %v416 = vpack.c.bf16 %v286, %v286
  %449 = vrot.lane.b32.xlu0 %v385, 96
  %v450 = vpop.permute.xlu0 %449
  %451 = vrot.lane.b32.xlu0 %v386, 96
  %v452 = vpop.permute.xlu0 %451
  %453 = vrot.lane.b32.xlu0 %v387, 96
  %v454 = vpop.permute.xlu0 %453
  %455 = vrot.lane.b32.xlu0 %v388, 96
  %v456 = vpop.permute.xlu0 %455
  %457 = vrot.lane.b32.xlu0 %v389, 96
  %v458 = vpop.permute.xlu0 %457
  %459 = vrot.lane.b32.xlu0 %v390, 96
  %v460 = vpop.permute.xlu0 %459
  %461 = vrot.lane.b32.xlu0 %v391, 96
  %v462 = vpop.permute.xlu0 %461
  %463 = vrot.lane.b32.xlu0 %v392, 96
  %v464 = vpop.permute.xlu0 %463
  %465 = vrot.lane.b32.xlu0 %v393, 96
  %v466 = vpop.permute.xlu0 %465
  %467 = vrot.lane.b32.xlu0 %v394, 96
  %v468 = vpop.permute.xlu0 %467
  %469 = vrot.lane.b32.xlu0 %v395, 96
  %v470 = vpop.permute.xlu0 %469
  %471 = vrot.lane.b32.xlu0 %v396, 96
  %v472 = vpop.permute.xlu0 %471
  %473 = vrot.lane.b32.xlu0 %v397, 96
  %v474 = vpop.permute.xlu0 %473
  %475 = vrot.lane.b32.xlu0 %v398, 96
  %v476 = vpop.permute.xlu0 %475
  %477 = vrot.lane.b32.xlu0 %v399, 96
  %v478 = vpop.permute.xlu0 %477
  %479 = vrot.lane.b32.xlu0 %v400, 96
  %v480 = vpop.permute.xlu0 %479
  %481 = vrot.lane.b32.xlu0 %v401, 96
  %v482 = vpop.permute.xlu0 %481
  %483 = vrot.lane.b32.xlu0 %v402, 96
  %v484 = vpop.permute.xlu0 %483
  %485 = vrot.lane.b32.xlu0 %v403, 96
  %v486 = vpop.permute.xlu0 %485
  %487 = vrot.lane.b32.xlu0 %v404, 96
  %v488 = vpop.permute.xlu0 %487
  %489 = vrot.lane.b32.xlu0 %v405, 96
  %v490 = vpop.permute.xlu0 %489
  %491 = vrot.lane.b32.xlu0 %v406, 96
  %v492 = vpop.permute.xlu0 %491
  %493 = vrot.lane.b32.xlu0 %v407, 96
  %v494 = vpop.permute.xlu0 %493
  %495 = vrot.lane.b32.xlu0 %v408, 96
  %v496 = vpop.permute.xlu0 %495
  %497 = vrot.lane.b32.xlu0 %v409, 96
  %v498 = vpop.permute.xlu0 %497
  %499 = vrot.lane.b32.xlu0 %v410, 96
  %v500 = vpop.permute.xlu0 %499
  %501 = vrot.lane.b32.xlu0 %v411, 96
  %v502 = vpop.permute.xlu0 %501
  %503 = vrot.lane.b32.xlu0 %v412, 96
  %v504 = vpop.permute.xlu0 %503
  %505 = vrot.lane.b32.xlu0 %v413, 96
  %v506 = vpop.permute.xlu0 %505
  %507 = vrot.lane.b32.xlu0 %v414, 96
  %v508 = vpop.permute.xlu0 %507
  %509 = vrot.lane.b32.xlu0 %v415, 96
  %v510 = vpop.permute.xlu0 %509
  %511 = vrot.lane.b32.xlu0 %v416, 96
  %v512 = vpop.permute.xlu0 %511
  %545 = vst.msk [vmem:[%s4] sm:$0xf] %vm352, %v450
  %546 = vst.msk [vmem:[%s4 + $0x4] sm:$0xf] %vm352, %v452
  %547 = vst.msk [vmem:[%s4 + $0x8] sm:$0xf] %vm352, %v454
  %548 = vst.msk [vmem:[%s4 + $0xc] sm:$0xf] %vm352, %v456
  %549 = vst.msk [vmem:[%s4 + $0x10] sm:$0xf] %vm352, %v458
  %550 = vst.msk [vmem:[%s4 + $0x14] sm:$0xf] %vm352, %v460
  %551 = vst.msk [vmem:[%s4 + $0x18] sm:$0xf] %vm352, %v462
  %552 = vst.msk [vmem:[%s4 + $0x1c] sm:$0xf] %vm352, %v464
  %553 = vst.msk [vmem:[%s4 + $0x20] sm:$0xf] %vm352, %v466
  %554 = vst.msk [vmem:[%s4 + $0x24] sm:$0xf] %vm352, %v468
  %555 = vst.msk [vmem:[%s4 + $0x28] sm:$0xf] %vm352, %v470
  %556 = vst.msk [vmem:[%s4 + $0x2c] sm:$0xf] %vm352, %v472
  %557 = vst.msk [vmem:[%s4 + $0x30] sm:$0xf] %vm352, %v474
  %558 = vst.msk [vmem:[%s4 + $0x34] sm:$0xf] %vm352, %v476
  %559 = vst.msk [vmem:[%s4 + $0x38] sm:$0xf] %vm352, %v478
  %560 = vst.msk [vmem:[%s4 + $0x3c] sm:$0xf] %vm352, %v480
  %561 = vst.msk [vmem:[%s4 + $0x40] sm:$0xf] %vm352, %v482
  %562 = vst.msk [vmem:[%s4 + $0x44] sm:$0xf] %vm352, %v484
  %563 = vst.msk [vmem:[%s4 + $0x48] sm:$0xf] %vm352, %v486
  %564 = vst.msk [vmem:[%s4 + $0x4c] sm:$0xf] %vm352, %v488
  %565 = vst.msk [vmem:[%s4 + $0x50] sm:$0xf] %vm352, %v490
  %566 = vst.msk [vmem:[%s4 + $0x54] sm:$0xf] %vm352, %v492
  %567 = vst.msk [vmem:[%s4 + $0x58] sm:$0xf] %vm352, %v494
  %568 = vst.msk [vmem:[%s4 + $0x5c] sm:$0xf] %vm352, %v496
  %569 = vst.msk [vmem:[%s4 + $0x60] sm:$0xf] %vm352, %v498
  %570 = vst.msk [vmem:[%s4 + $0x64] sm:$0xf] %vm352, %v500
  %571 = vst.msk [vmem:[%s4 + $0x68] sm:$0xf] %vm352, %v502
  %572 = vst.msk [vmem:[%s4 + $0x6c] sm:$0xf] %vm352, %v504
  %573 = vst.msk [vmem:[%s4 + $0x70] sm:$0xf] %vm352, %v506
  %574 = vst.msk [vmem:[%s4 + $0x74] sm:$0xf] %vm352, %v508
  %575 = vst.msk [vmem:[%s4 + $0x78] sm:$0xf] %vm352, %v510
  %576 = vst.msk [vmem:[%s4 + $0x7c] sm:$0xf] %vm352, %v512
  %577 = vrot.lane.b32.xlu0 %v385, 64
  %v578 = vpop.permute.xlu0 %577
  %579 = vrot.lane.b32.xlu0 %v386, 64
  %v580 = vpop.permute.xlu0 %579
  %581 = vrot.lane.b32.xlu0 %v387, 64
  %v582 = vpop.permute.xlu0 %581
  %583 = vrot.lane.b32.xlu0 %v388, 64
  %v584 = vpop.permute.xlu0 %583
  %585 = vrot.lane.b32.xlu0 %v389, 64
  %v586 = vpop.permute.xlu0 %585
  %587 = vrot.lane.b32.xlu0 %v390, 64
  %v588 = vpop.permute.xlu0 %587
  %589 = vrot.lane.b32.xlu0 %v391, 64
  %v590 = vpop.permute.xlu0 %589
  %591 = vrot.lane.b32.xlu0 %v392, 64
  %v592 = vpop.permute.xlu0 %591
  %593 = vrot.lane.b32.xlu0 %v393, 64
  %v594 = vpop.permute.xlu0 %593
  %595 = vrot.lane.b32.xlu0 %v394, 64
  %v596 = vpop.permute.xlu0 %595
  %597 = vrot.lane.b32.xlu0 %v395, 64
  %v598 = vpop.permute.xlu0 %597
  %599 = vrot.lane.b32.xlu0 %v396, 64
  %v600 = vpop.permute.xlu0 %599
  %601 = vrot.lane.b32.xlu0 %v397, 64
  %v602 = vpop.permute.xlu0 %601
  %603 = vrot.lane.b32.xlu0 %v398, 64
  %v604 = vpop.permute.xlu0 %603
  %605 = vrot.lane.b32.xlu0 %v399, 64
  %v606 = vpop.permute.xlu0 %605
  %607 = vrot.lane.b32.xlu0 %v400, 64
  %v608 = vpop.permute.xlu0 %607
  %609 = vrot.lane.b32.xlu0 %v401, 64
  %v610 = vpop.permute.xlu0 %609
  %611 = vrot.lane.b32.xlu0 %v402, 64
  %v612 = vpop.permute.xlu0 %611
  %613 = vrot.lane.b32.xlu0 %v403, 64
  %v614 = vpop.permute.xlu0 %613
  %615 = vrot.lane.b32.xlu0 %v404, 64
  %v616 = vpop.permute.xlu0 %615
  %617 = vrot.lane.b32.xlu0 %v405, 64
  %v618 = vpop.permute.xlu0 %617
  %619 = vrot.lane.b32.xlu0 %v406, 64
  %v620 = vpop.permute.xlu0 %619
  %621 = vrot.lane.b32.xlu0 %v407, 64
  %v622 = vpop.permute.xlu0 %621
  %623 = vrot.lane.b32.xlu0 %v408, 64
  %v624 = vpop.permute.xlu0 %623
  %625 = vrot.lane.b32.xlu0 %v409, 64
  %v626 = vpop.permute.xlu0 %625
  %627 = vrot.lane.b32.xlu0 %v410, 64
  %v628 = vpop.permute.xlu0 %627
  %629 = vrot.lane.b32.xlu0 %v411, 64
  %v630 = vpop.permute.xlu0 %629
  %631 = vrot.lane.b32.xlu0 %v412, 64
  %v632 = vpop.permute.xlu0 %631
  %633 = vrot.lane.b32.xlu0 %v413, 64
  %v634 = vpop.permute.xlu0 %633
  %635 = vrot.lane.b32.xlu0 %v414, 64
  %v636 = vpop.permute.xlu0 %635
  %637 = vrot.lane.b32.xlu0 %v415, 64
  %v638 = vpop.permute.xlu0 %637
  %639 = vrot.lane.b32.xlu0 %v416, 64
  %v640 = vpop.permute.xlu0 %639
  %673 = vst.msk [vmem:[%s5] sm:$0xf] %vm352, %v578
  %674 = vst.msk [vmem:[%s5 + $0x4] sm:$0xf] %vm352, %v580
  %675 = vst.msk [vmem:[%s5 + $0x8] sm:$0xf] %vm352, %v582
  %676 = vst.msk [vmem:[%s5 + $0xc] sm:$0xf] %vm352, %v584
  %677 = vst.msk [vmem:[%s5 + $0x10] sm:$0xf] %vm352, %v586
  %678 = vst.msk [vmem:[%s5 + $0x14] sm:$0xf] %vm352, %v588
  %679 = vst.msk [vmem:[%s5 + $0x18] sm:$0xf] %vm352, %v590
  %680 = vst.msk [vmem:[%s5 + $0x1c] sm:$0xf] %vm352, %v592
  %681 = vst.msk [vmem:[%s5 + $0x20] sm:$0xf] %vm352, %v594
  %682 = vst.msk [vmem:[%s5 + $0x24] sm:$0xf] %vm352, %v596
  %683 = vst.msk [vmem:[%s5 + $0x28] sm:$0xf] %vm352, %v598
  %684 = vst.msk [vmem:[%s5 + $0x2c] sm:$0xf] %vm352, %v600
  %685 = vst.msk [vmem:[%s5 + $0x30] sm:$0xf] %vm352, %v602
  %686 = vst.msk [vmem:[%s5 + $0x34] sm:$0xf] %vm352, %v604
  %687 = vst.msk [vmem:[%s5 + $0x38] sm:$0xf] %vm352, %v606
  %688 = vst.msk [vmem:[%s5 + $0x3c] sm:$0xf] %vm352, %v608
  %689 = vst.msk [vmem:[%s5 + $0x40] sm:$0xf] %vm352, %v610
  %690 = vst.msk [vmem:[%s5 + $0x44] sm:$0xf] %vm352, %v612
  %691 = vst.msk [vmem:[%s5 + $0x48] sm:$0xf] %vm352, %v614
  %692 = vst.msk [vmem:[%s5 + $0x4c] sm:$0xf] %vm352, %v616
  %693 = vst.msk [vmem:[%s5 + $0x50] sm:$0xf] %vm352, %v618
  %694 = vst.msk [vmem:[%s5 + $0x54] sm:$0xf] %vm352, %v620
  %695 = vst.msk [vmem:[%s5 + $0x58] sm:$0xf] %vm352, %v622
  %696 = vst.msk [vmem:[%s5 + $0x5c] sm:$0xf] %vm352, %v624
  %697 = vst.msk [vmem:[%s5 + $0x60] sm:$0xf] %vm352, %v626
  %698 = vst.msk [vmem:[%s5 + $0x64] sm:$0xf] %vm352, %v628
  %699 = vst.msk [vmem:[%s5 + $0x68] sm:$0xf] %vm352, %v630
  %700 = vst.msk [vmem:[%s5 + $0x6c] sm:$0xf] %vm352, %v632
  %701 = vst.msk [vmem:[%s5 + $0x70] sm:$0xf] %vm352, %v634
  %702 = vst.msk [vmem:[%s5 + $0x74] sm:$0xf] %vm352, %v636
  %703 = vst.msk [vmem:[%s5 + $0x78] sm:$0xf] %vm352, %v638
  %704 = vst.msk [vmem:[%s5 + $0x7c] sm:$0xf] %vm352, %v640
  // Predicated region
  $region14: #{tpu_custom_call.1} parent=0 // pred_check
    _
  $region15: #{tpu_custom_call.1} parent=0 // pred_check_branch
    %706 = sbr.rel (0) target = $region17
  $region16: #{tpu_custom_call.1} parent=0 // pred_region
    _
  $region17: #{tpu_custom_call.1} parent=0 // pred_fallthru
    _
  // Predicated region
  $region18: #{tpu_custom_call.1} parent=0 // pred_check
    _
  $region19: #{tpu_custom_call.1} parent=0 // pred_check_branch
    %708 = sbr.rel (0) target = $region21
  $region20: #{tpu_custom_call.1} parent=0 // pred_region
    _
  $region21: #{tpu_custom_call.1} parent=0 // pred_fallthru
    _
  // Predicated region
  $region22: #{tpu_custom_call.1} parent=0 // pred_check
    _
  $region23: #{tpu_custom_call.1} parent=0 // pred_check_branch
    %710 = sbr.rel (0) target = $region25
  $region24: #{tpu_custom_call.1} parent=0 // pred_region
    _
  $region25: #{tpu_custom_call.1} parent=0 // pred_fallthru
    _
  // Predicated region
  $region26: #{tpu_custom_call.1} parent=0 // pred_check
    _
  $region27: #{tpu_custom_call.1} parent=0 // pred_check_branch
    %712 = sbr.rel (0) target = $region29
  $region28: #{tpu_custom_call.1} parent=0 // pred_region
    _
  $region29: #{tpu_custom_call.1} parent=0 // pred_fallthru
    _
  // Predicated region
  $region30: #{tpu_custom_call.1} parent=0 // pred_check
    _
  $region31: #{tpu_custom_call.1} parent=0 // pred_check_branch
    %714 = sbr.rel (0) target = $region33
  $region32: #{tpu_custom_call.1} parent=0 // pred_region
    _
  $region33: #{tpu_custom_call.1} parent=0 // pred_fallthru
    _
  // Predicated region
  $region34: #{tpu_custom_call.1} parent=0 // pred_check
    _
  $region35: #{tpu_custom_call.1} parent=0 // pred_check_branch
    %716 = sbr.rel (0) target = $region37
  $region36: #{tpu_custom_call.1} parent=0 // pred_region
    _
  $region37: #{tpu_custom_call.1} parent=0 // pred_fallthru
    _

// kernel: tpu_custom_call.1
$region0: #{tpu_custom_call.1}
  #allocation0 [shape = 'u32[]', space=smem, size = 0x4, offset = 0x4, fixed_abs, tag = 'smem constant byte address 0x4 - core index']
  #allocation1 [shape = 'u32[72,128]{1,0:T(1,128)}', space=vmem, size = 0x9000, scoped, tag = 'internal scratch']
  %s0 = inlined_call_operand.vmem [shape: bf16[256,32], index: 0, kind: input, shape index: {}]
  %s1 = inlined_call_operand.vmem [shape: bf16[32,96], index: 1, kind: input, shape index: {}]
  %s2 = inlined_call_operand.vmem [shape: f32[1,96], index: 2, kind: input, shape index: {}]
  %s3 = inlined_call_operand.vmem [shape: bf16[256,32], index: 3, kind: output, shape index: {0}]
  %s4 = inlined_call_operand.vmem [shape: bf16[256,32], index: 4, kind: output, shape index: {1}]
  %s5 = inlined_call_operand.vmem [shape: bf16[256,32], index: 5, kind: output, shape index: {2}]
  %6 = xla_tuple %s3, %s4, %s5
  %s7 = sld [smem:[#allocation0]]
  $region38: #{tpu_custom_call.1} parent=0
    _
  %s9 = ssub.s32 1, %s7
  %s10 = scalar_select 0, %s9, %s7
  // Predicated region
  $region2: #{tpu_custom_call.1} parent=0 // pred_check
    _
  $region3: #{tpu_custom_call.1} parent=0 // pred_check_branch
    %12 = sbr.rel (0) target = $region5
  $region4: #{tpu_custom_call.1} parent=0 // pred_region
    _
  $region5: #{tpu_custom_call.1} parent=0 // pred_fallthru
    _
  // Predicated region
  $region6: #{tpu_custom_call.1} parent=0 // pred_check
    _
  $region7: #{tpu_custom_call.1} parent=0 // pred_check_branch
    %14 = sbr.rel (0) target = $region9
  $region8: #{tpu_custom_call.1} parent=0 // pred_region
    _
  $region9: #{tpu_custom_call.1} parent=0 // pred_fallthru
    _
  // Predicated region
  $region10: #{tpu_custom_call.1} parent=0 // pred_check
    _
  $region11: #{tpu_custom_call.1} parent=0 // pred_check_branch
    %16 = sbr.rel (0) target = $region13
  $region12: #{tpu_custom_call.1} parent=0 // pred_region
    _
  $region13: #{tpu_custom_call.1} parent=0 // pred_fallthru
    _
  %v18 = vld [vmem:[%s0] sm:$0xf]
  %v19 = vld [vmem:[%s0 + $0x4] sm:$0xf]
  %v20 = vld [vmem:[%s0 + $0x8] sm:$0xf]
  %v21 = vld [vmem:[%s0 + $0xc] sm:$0xf]
  %v22 = vld [vmem:[%s0 + $0x10] sm:$0xf]
  %v23 = vld [vmem:[%s0 + $0x14] sm:$0xf]
  %v24 = vld [vmem:[%s0 + $0x18] sm:$0xf]
  %v25 = vld [vmem:[%s0 + $0x1c] sm:$0xf]
  %v26 = vld [vmem:[%s0 + $0x20] sm:$0xf]
  %v27 = vld [vmem:[%s0 + $0x24] sm:$0xf]
  %v28 = vld [vmem:[%s0 + $0x28] sm:$0xf]
  %v29 = vld [vmem:[%s0 + $0x2c] sm:$0xf]
  %v30 = vld [vmem:[%s0 + $0x30] sm:$0xf]
  %v31 = vld [vmem:[%s0 + $0x34] sm:$0xf]
  %v32 = vld [vmem:[%s0 + $0x38] sm:$0xf]
  %v33 = vld [vmem:[%s0 + $0x3c] sm:$0xf]
  %v34 = vld [vmem:[%s0 + $0x40] sm:$0xf]
  %v35 = vld [vmem:[%s0 + $0x44] sm:$0xf]
  %v36 = vld [vmem:[%s0 + $0x48] sm:$0xf]
  %v37 = vld [vmem:[%s0 + $0x4c] sm:$0xf]
  %v38 = vld [vmem:[%s0 + $0x50] sm:$0xf]
  %v39 = vld [vmem:[%s0 + $0x54] sm:$0xf]
  %v40 = vld [vmem:[%s0 + $0x58] sm:$0xf]
  %v41 = vld [vmem:[%s0 + $0x5c] sm:$0xf]
  %v42 = vld [vmem:[%s0 + $0x60] sm:$0xf]
  %v43 = vld [vmem:[%s0 + $0x64] sm:$0xf]
  %v44 = vld [vmem:[%s0 + $0x68] sm:$0xf]
  %v45 = vld [vmem:[%s0 + $0x6c] sm:$0xf]
  %v46 = vld [vmem:[%s0 + $0x70] sm:$0xf]
  %v47 = vld [vmem:[%s0 + $0x74] sm:$0xf]
  %v48 = vld [vmem:[%s0 + $0x78] sm:$0xf]
  %v49 = vld [vmem:[%s0 + $0x7c] sm:$0xf]
  %v50 = vld [vmem:[%s1] sm:$0xf]
  %v51 = vld [vmem:[%s1 + $0x4] sm:$0xf]
  %v52 = vld [vmem:[%s1 + $0x8] sm:$0xf]
  %v53 = vld [vmem:[%s1 + $0xc] sm:$0xf]
  %v54 = vld [vmem:[%s2] sm:$0x1]
  %v56 = vperm.slane %v54, 0
  %v90 = vunpack.c.l.b16 %v18
  %v91 = vunpack.c.l.b16 %v19
  %v92 = vunpack.c.l.b16 %v20
  %v93 = vunpack.c.l.b16 %v21
  %v94 = vunpack.c.l.b16 %v22
  %v95 = vunpack.c.l.b16 %v23
  %v96 = vunpack.c.l.b16 %v24
  %v97 = vunpack.c.l.b16 %v25
  %v98 = vunpack.c.l.b16 %v26
  %v99 = vunpack.c.l.b16 %v27
  %v100 = vunpack.c.l.b16 %v28
  %v101 = vunpack.c.l.b16 %v29
  %v102 = vunpack.c.l.b16 %v30
  %v103 = vunpack.c.l.b16 %v31
  %v104 = vunpack.c.l.b16 %v32
  %v105 = vunpack.c.l.b16 %v33
  %v106 = vunpack.c.l.b16 %v34
  %v107 = vunpack.c.l.b16 %v35
  %v108 = vunpack.c.l.b16 %v36
  %v109 = vunpack.c.l.b16 %v37
  %v110 = vunpack.c.l.b16 %v38
  %v111 = vunpack.c.l.b16 %v39
  %v112 = vunpack.c.l.b16 %v40
  %v113 = vunpack.c.l.b16 %v41
  %v114 = vunpack.c.l.b16 %v42
  %v115 = vunpack.c.l.b16 %v43
  %v116 = vunpack.c.l.b16 %v44
  %v117 = vunpack.c.l.b16 %v45
  %v118 = vunpack.c.l.b16 %v46
  %v119 = vunpack.c.l.b16 %v47
  %v120 = vunpack.c.l.b16 %v48
  %v121 = vunpack.c.l.b16 %v49
  %v122 = vpack.c.b16 %v91, %v90
  %v123 = vpack.c.b16 %v93, %v92
  %v124 = vpack.c.b16 %v95, %v94
  %v125 = vpack.c.b16 %v97, %v96
  %v126 = vpack.c.b16 %v99, %v98
  %v127 = vpack.c.b16 %v101, %v100
  %v128 = vpack.c.b16 %v103, %v102
  %v129 = vpack.c.b16 %v105, %v104
  %v130 = vpack.c.b16 %v107, %v106
  %v131 = vpack.c.b16 %v109, %v108
  %v132 = vpack.c.b16 %v111, %v110
  %v133 = vpack.c.b16 %v113, %v112
  %v134 = vpack.c.b16 %v115, %v114
  %v135 = vpack.c.b16 %v117, %v116
  %v136 = vpack.c.b16 %v119, %v118
  %v137 = vpack.c.b16 %v121, %v120
  %v142 = vunpack.c.l.b16 %v50
  %v143 = vunpack.c.l.b16 %v51
  %v144 = vunpack.c.l.b16 %v52
  %v145 = vunpack.c.l.b16 %v53
  %v146 = vpack.c.b16 %v143, %v142
  %v147 = vpack.c.b16 %v145, %v144
  %vm150 = vcmask 261120
  %v152 = vsel %vm150, %v122, 0
  %v155 = vsel %vm150, %v123, 0
  %v158 = vsel %vm150, %v124, 0
  %v161 = vsel %vm150, %v125, 0
  %v164 = vsel %vm150, %v126, 0
  %v167 = vsel %vm150, %v127, 0
  %v170 = vsel %vm150, %v128, 0
  %v173 = vsel %vm150, %v129, 0
  %v176 = vsel %vm150, %v130, 0
  %v179 = vsel %vm150, %v131, 0
  %v182 = vsel %vm150, %v132, 0
  %v185 = vsel %vm150, %v133, 0
  %v188 = vsel %vm150, %v134, 0
  %v191 = vsel %vm150, %v135, 0
  %v194 = vsel %vm150, %v136, 0
  %v197 = vsel %vm150, %v137, 0
  %199 = vmatpush.bf16.msra.mxu0 0
  %200 = vmatpush.bf16.msra.mxu0 0
  %201 = vmatpush.bf16.msra.mxu0 0
  %202 = vmatpush.bf16.msra.mxu0 0
  %203 = vmatpush.bf16.msra.mxu0 0
  %204 = vmatpush.bf16.msra.mxu0 0
  %205 = vmatpush.bf16.msra.mxu0 %v147
  %206 = vmatpush.bf16.msra.mxu0 %v146
  %207 = vmatmul.bf16.gmra.mxu0 %v152
  %v208 = vpop.f32.mrf.mxu0
  %v209 = vadd.f32 %v56, %v208
  %v210 = vpop.f32.mrf.mxu0
  %v211 = vadd.f32 %v56, %v210
  %212 = vmatmul.bf16.gmra.mxu0 %v155
  %v213 = vpop.f32.mrf.mxu0
  %v214 = vadd.f32 %v56, %v213
  %v215 = vpop.f32.mrf.mxu0
  %v216 = vadd.f32 %v56, %v215
  %217 = vmatmul.bf16.gmra.mxu0 %v158
  %v218 = vpop.f32.mrf.mxu0
  %v219 = vadd.f32 %v56, %v218
  %v220 = vpop.f32.mrf.mxu0
  %v221 = vadd.f32 %v56, %v220
  %222 = vmatmul.bf16.gmra.mxu0 %v161
  %v223 = vpop.f32.mrf.mxu0
  %v224 = vadd.f32 %v56, %v223
  %v225 = vpop.f32.mrf.mxu0
  %v226 = vadd.f32 %v56, %v225
  %227 = vmatmul.bf16.gmra.mxu0 %v164
  %v228 = vpop.f32.mrf.mxu0
  %v229 = vadd.f32 %v56, %v228
  %v230 = vpop.f32.mrf.mxu0
  %v231 = vadd.f32 %v56, %v230
  %232 = vmatmul.bf16.gmra.mxu0 %v167
  %v233 = vpop.f32.mrf.mxu0
  %v234 = vadd.f32 %v56, %v233
  %v235 = vpop.f32.mrf.mxu0
  %v236 = vadd.f32 %v56, %v235
  %237 = vmatmul.bf16.gmra.mxu0 %v170
  %v238 = vpop.f32.mrf.mxu0
  %v239 = vadd.f32 %v56, %v238
  %v240 = vpop.f32.mrf.mxu0
  %v241 = vadd.f32 %v56, %v240
  %242 = vmatmul.bf16.gmra.mxu0 %v173
  %v243 = vpop.f32.mrf.mxu0
  %v244 = vadd.f32 %v56, %v243
  %v245 = vpop.f32.mrf.mxu0
  %v246 = vadd.f32 %v56, %v245
  %247 = vmatmul.bf16.gmra.mxu0 %v176
  %v248 = vpop.f32.mrf.mxu0
  %v249 = vadd.f32 %v56, %v248
  %v250 = vpop.f32.mrf.mxu0
  %v251 = vadd.f32 %v56, %v250
  %252 = vmatmul.bf16.gmra.mxu0 %v179
  %v253 = vpop.f32.mrf.mxu0
  %v254 = vadd.f32 %v56, %v253
  %v255 = vpop.f32.mrf.mxu0
  %v256 = vadd.f32 %v56, %v255
  %257 = vmatmul.bf16.gmra.mxu0 %v182
  %v258 = vpop.f32.mrf.mxu0
  %v259 = vadd.f32 %v56, %v258
  %v260 = vpop.f32.mrf.mxu0
  %v261 = vadd.f32 %v56, %v260
  %262 = vmatmul.bf16.gmra.mxu0 %v185
  %v263 = vpop.f32.mrf.mxu0
  %v264 = vadd.f32 %v56, %v263
  %v265 = vpop.f32.mrf.mxu0
  %v266 = vadd.f32 %v56, %v265
  %267 = vmatmul.bf16.gmra.mxu0 %v188
  %v268 = vpop.f32.mrf.mxu0
  %v269 = vadd.f32 %v56, %v268
  %v270 = vpop.f32.mrf.mxu0
  %v271 = vadd.f32 %v56, %v270
  %272 = vmatmul.bf16.gmra.mxu0 %v191
  %v273 = vpop.f32.mrf.mxu0
  %v274 = vadd.f32 %v56, %v273
  %v275 = vpop.f32.mrf.mxu0
  %v276 = vadd.f32 %v56, %v275
  %277 = vmatmul.bf16.gmra.mxu0 %v194
  %v278 = vpop.f32.mrf.mxu0
  %v279 = vadd.f32 %v56, %v278
  %v280 = vpop.f32.mrf.mxu0
  %v281 = vadd.f32 %v56, %v280
  %282 = vmatmul.bf16.gmra.mxu0 %v197
  %v283 = vpop.f32.mrf.mxu0
  %v284 = vadd.f32 %v56, %v283
  %v285 = vpop.f32.mrf.mxu0
  %v286 = vadd.f32 %v56, %v285
  %287 = vdwg.mxu0
  %v288 = vmul.f32 %v209, 0.17677669
  %v289 = vmul.f32 %v211, 0.17677669
  %v290 = vmul.f32 %v214, 0.17677669
  %v291 = vmul.f32 %v216, 0.17677669
  %v292 = vmul.f32 %v219, 0.17677669
  %v293 = vmul.f32 %v221, 0.17677669
  %v294 = vmul.f32 %v224, 0.17677669
  %v295 = vmul.f32 %v226, 0.17677669
  %v296 = vmul.f32 %v229, 0.17677669
  %v297 = vmul.f32 %v231, 0.17677669
  %v298 = vmul.f32 %v234, 0.17677669
  %v299 = vmul.f32 %v236, 0.17677669
  %v300 = vmul.f32 %v239, 0.17677669
  %v301 = vmul.f32 %v241, 0.17677669
  %v302 = vmul.f32 %v244, 0.17677669
  %v303 = vmul.f32 %v246, 0.17677669
  %v304 = vmul.f32 %v249, 0.17677669
  %v305 = vmul.f32 %v251, 0.17677669
  %v306 = vmul.f32 %v254, 0.17677669
  %v307 = vmul.f32 %v256, 0.17677669
  %v308 = vmul.f32 %v259, 0.17677669
  %v309 = vmul.f32 %v261, 0.17677669
  %v310 = vmul.f32 %v264, 0.17677669
  %v311 = vmul.f32 %v266, 0.17677669
  %v312 = vmul.f32 %v269, 0.17677669
  %v313 = vmul.f32 %v271, 0.17677669
  %v314 = vmul.f32 %v274, 0.17677669
  %v315 = vmul.f32 %v276, 0.17677669
  %v316 = vmul.f32 %v279, 0.17677669
  %v317 = vmul.f32 %v281, 0.17677669
  %v318 = vmul.f32 %v284, 0.17677669
  %v319 = vmul.f32 %v286, 0.17677669
  %v320 = vpack.c.bf16 %v288, %v288
  %v321 = vpack.c.bf16 %v289, %v289
  %v322 = vpack.c.bf16 %v290, %v290
  %v323 = vpack.c.bf16 %v291, %v291
  %v324 = vpack.c.bf16 %v292, %v292
  %v325 = vpack.c.bf16 %v293, %v293
  %v326 = vpack.c.bf16 %v294, %v294
  %v327 = vpack.c.bf16 %v295, %v295
  %v328 = vpack.c.bf16 %v296, %v296
  %v329 = vpack.c.bf16 %v297, %v297
  %v330 = vpack.c.bf16 %v298, %v298
  %v331 = vpack.c.bf16 %v299, %v299
  %v332 = vpack.c.bf16 %v300, %v300
  %v333 = vpack.c.bf16 %v301, %v301
  %v334 = vpack.c.bf16 %v302, %v302
  %v335 = vpack.c.bf16 %v303, %v303
  %v336 = vpack.c.bf16 %v304, %v304
  %v337 = vpack.c.bf16 %v305, %v305
  %v338 = vpack.c.bf16 %v306, %v306
  %v339 = vpack.c.bf16 %v307, %v307
  %v340 = vpack.c.bf16 %v308, %v308
  %v341 = vpack.c.bf16 %v309, %v309
  %v342 = vpack.c.bf16 %v310, %v310
  %v343 = vpack.c.bf16 %v311, %v311
  %v344 = vpack.c.bf16 %v312, %v312
  %v345 = vpack.c.bf16 %v313, %v313
  %v346 = vpack.c.bf16 %v314, %v314
  %v347 = vpack.c.bf16 %v315, %v315
  %v348 = vpack.c.bf16 %v316, %v316
  %v349 = vpack.c.bf16 %v317, %v317
  %v350 = vpack.c.bf16 %v318, %v318
  %v351 = vpack.c.bf16 %v319, %v319
  %vm352 = vcmask 257024
  %353 = vst.msk [vmem:[%s3] sm:$0xf] %vm352, %v320
  %354 = vst.msk [vmem:[%s3 + $0x4] sm:$0xf] %vm352, %v321
  %355 = vst.msk [vmem:[%s3 + $0x8] sm:$0xf] %vm352, %v322
  %356 = vst.msk [vmem:[%s3 + $0xc] sm:$0xf] %vm352, %v323
  %357 = vst.msk [vmem:[%s3 + $0x10] sm:$0xf] %vm352, %v324
  %358 = vst.msk [vmem:[%s3 + $0x14] sm:$0xf] %vm352, %v325
  %359 = vst.msk [vmem:[%s3 + $0x18] sm:$0xf] %vm352, %v326
  %360 = vst.msk [vmem:[%s3 + $0x1c] sm:$0xf] %vm352, %v327
  %361 = vst.msk [vmem:[%s3 + $0x20] sm:$0xf] %vm352, %v328
  %362 = vst.msk [vmem:[%s3 + $0x24] sm:$0xf] %vm352, %v329
  %363 = vst.msk [vmem:[%s3 + $0x28] sm:$0xf] %vm352, %v330
  %364 = vst.msk [vmem:[%s3 + $0x2c] sm:$0xf] %vm352, %v331
  %365 = vst.msk [vmem:[%s3 + $0x30] sm:$0xf] %vm352, %v332
  %366 = vst.msk [vmem:[%s3 + $0x34] sm:$0xf] %vm352, %v333
  %367 = vst.msk [vmem:[%s3 + $0x38] sm:$0xf] %vm352, %v334
  %368 = vst.msk [vmem:[%s3 + $0x3c] sm:$0xf] %vm352, %v335
  %369 = vst.msk [vmem:[%s3 + $0x40] sm:$0xf] %vm352, %v336
  %370 = vst.msk [vmem:[%s3 + $0x44] sm:$0xf] %vm352, %v337
  %371 = vst.msk [vmem:[%s3 + $0x48] sm:$0xf] %vm352, %v338
  %372 = vst.msk [vmem:[%s3 + $0x4c] sm:$0xf] %vm352, %v339
  %373 = vst.msk [vmem:[%s3 + $0x50] sm:$0xf] %vm352, %v340
  %374 = vst.msk [vmem:[%s3 + $0x54] sm:$0xf] %vm352, %v341
  %375 = vst.msk [vmem:[%s3 + $0x58] sm:$0xf] %vm352, %v342
  %376 = vst.msk [vmem:[%s3 + $0x5c] sm:$0xf] %vm352, %v343
  %377 = vst.msk [vmem:[%s3 + $0x60] sm:$0xf] %vm352, %v344
  %378 = vst.msk [vmem:[%s3 + $0x64] sm:$0xf] %vm352, %v345
  %379 = vst.msk [vmem:[%s3 + $0x68] sm:$0xf] %vm352, %v346
  %380 = vst.msk [vmem:[%s3 + $0x6c] sm:$0xf] %vm352, %v347
  %381 = vst.msk [vmem:[%s3 + $0x70] sm:$0xf] %vm352, %v348
  %382 = vst.msk [vmem:[%s3 + $0x74] sm:$0xf] %vm352, %v349
  %383 = vst.msk [vmem:[%s3 + $0x78] sm:$0xf] %vm352, %v350
  %384 = vst.msk [vmem:[%s3 + $0x7c] sm:$0xf] %vm352, %v351
  %v385 = vpack.c.bf16 %v209, %v209
  %v386 = vpack.c.bf16 %v211, %v211
  %v387 = vpack.c.bf16 %v214, %v214
  %v388 = vpack.c.bf16 %v216, %v216
  %v389 = vpack.c.bf16 %v219, %v219
  %v390 = vpack.c.bf16 %v221, %v221
  %v391 = vpack.c.bf16 %v224, %v224
  %v392 = vpack.c.bf16 %v226, %v226
  %v393 = vpack.c.bf16 %v229, %v229
  %v394 = vpack.c.bf16 %v231, %v231
  %v395 = vpack.c.bf16 %v234, %v234
  %v396 = vpack.c.bf16 %v236, %v236
  %v397 = vpack.c.bf16 %v239, %v239
  %v398 = vpack.c.bf16 %v241, %v241
  %v399 = vpack.c.bf16 %v244, %v244
  %v400 = vpack.c.bf16 %v246, %v246
  %v401 = vpack.c.bf16 %v249, %v249
  %v402 = vpack.c.bf16 %v251, %v251
  %v403 = vpack.c.bf16 %v254, %v254
  %v404 = vpack.c.bf16 %v256, %v256
  %v405 = vpack.c.bf16 %v259, %v259
  %v406 = vpack.c.bf16 %v261, %v261
  %v407 = vpack.c.bf16 %v264, %v264
  %v408 = vpack.c.bf16 %v266, %v266
  %v409 = vpack.c.bf16 %v269, %v269
  %v410 = vpack.c.bf16 %v271, %v271
  %v411 = vpack.c.bf16 %v274, %v274
  %v412 = vpack.c.bf16 %v276, %v276
  %v413 = vpack.c.bf16 %v279, %v279
  %v414 = vpack.c.bf16 %v281, %v281
  %v415 = vpack.c.bf16 %v284, %v284
  %v416 = vpack.c.bf16 %v286, %v286
  %449 = vrot.lane.b32.xlu0 %v385, 96
  %v450 = vpop.permute.xlu0 %449
  %451 = vrot.lane.b32.xlu0 %v386, 96
  %v452 = vpop.permute.xlu0 %451
  %453 = vrot.lane.b32.xlu0 %v387, 96
  %v454 = vpop.permute.xlu0 %453
  %455 = vrot.lane.b32.xlu0 %v388, 96
  %v456 = vpop.permute.xlu0 %455
  %457 = vrot.lane.b32.xlu0 %v389, 96
  %v458 = vpop.permute.xlu0 %457
  %459 = vrot.lane.b32.xlu0 %v390, 96
  %v460 = vpop.permute.xlu0 %459
  %461 = vrot.lane.b32.xlu0 %v391, 96
  %v462 = vpop.permute.xlu0 %461
  %463 = vrot.lane.b32.xlu0 %v392, 96
  %v464 = vpop.permute.xlu0 %463
  %465 = vrot.lane.b32.xlu0 %v393, 96
  %v466 = vpop.permute.xlu0 %465
  %467 = vrot.lane.b32.xlu0 %v394, 96
  %v468 = vpop.permute.xlu0 %467
  %469 = vrot.lane.b32.xlu0 %v395, 96
  %v470 = vpop.permute.xlu0 %469
  %471 = vrot.lane.b32.xlu0 %v396, 96
  %v472 = vpop.permute.xlu0 %471
  %473 = vrot.lane.b32.xlu0 %v397, 96
  %v474 = vpop.permute.xlu0 %473
  %475 = vrot.lane.b32.xlu0 %v398, 96
  %v476 = vpop.permute.xlu0 %475
  %477 = vrot.lane.b32.xlu0 %v399, 96
  %v478 = vpop.permute.xlu0 %477
  %479 = vrot.lane.b32.xlu0 %v400, 96
  %v480 = vpop.permute.xlu0 %479
  %481 = vrot.lane.b32.xlu0 %v401, 96
  %v482 = vpop.permute.xlu0 %481
  %483 = vrot.lane.b32.xlu0 %v402, 96
  %v484 = vpop.permute.xlu0 %483
  %485 = vrot.lane.b32.xlu0 %v403, 96
  %v486 = vpop.permute.xlu0 %485
  %487 = vrot.lane.b32.xlu0 %v404, 96
  %v488 = vpop.permute.xlu0 %487
  %489 = vrot.lane.b32.xlu0 %v405, 96
  %v490 = vpop.permute.xlu0 %489
  %491 = vrot.lane.b32.xlu0 %v406, 96
  %v492 = vpop.permute.xlu0 %491
  %493 = vrot.lane.b32.xlu0 %v407, 96
  %v494 = vpop.permute.xlu0 %493
  %495 = vrot.lane.b32.xlu0 %v408, 96
  %v496 = vpop.permute.xlu0 %495
  %497 = vrot.lane.b32.xlu0 %v409, 96
  %v498 = vpop.permute.xlu0 %497
  %499 = vrot.lane.b32.xlu0 %v410, 96
  %v500 = vpop.permute.xlu0 %499
  %501 = vrot.lane.b32.xlu0 %v411, 96
  %v502 = vpop.permute.xlu0 %501
  %503 = vrot.lane.b32.xlu0 %v412, 96
  %v504 = vpop.permute.xlu0 %503
  %505 = vrot.lane.b32.xlu0 %v413, 96
  %v506 = vpop.permute.xlu0 %505
  %507 = vrot.lane.b32.xlu0 %v414, 96
  %v508 = vpop.permute.xlu0 %507
  %509 = vrot.lane.b32.xlu0 %v415, 96
  %v510 = vpop.permute.xlu0 %509
  %511 = vrot.lane.b32.xlu0 %v416, 96
  %v512 = vpop.permute.xlu0 %511
  %545 = vst.msk [vmem:[%s4] sm:$0xf] %vm352, %v450
  %546 = vst.msk [vmem:[%s4 + $0x4] sm:$0xf] %vm352, %v452
  %547 = vst.msk [vmem:[%s4 + $0x8] sm:$0xf] %vm352, %v454
  %548 = vst.msk [vmem:[%s4 + $0xc] sm:$0xf] %vm352, %v456
  %549 = vst.msk [vmem:[%s4 + $0x10] sm:$0xf] %vm352, %v458
  %550 = vst.msk [vmem:[%s4 + $0x14] sm:$0xf] %vm352, %v460
  %551 = vst.msk [vmem:[%s4 + $0x18] sm:$0xf] %vm352, %v462
  %552 = vst.msk [vmem:[%s4 + $0x1c] sm:$0xf] %vm352, %v464
  %553 = vst.msk [vmem:[%s4 + $0x20] sm:$0xf] %vm352, %v466
  %554 = vst.msk [vmem:[%s4 + $0x24] sm:$0xf] %vm352, %v468
  %555 = vst.msk [vmem:[%s4 + $0x28] sm:$0xf] %vm352, %v470
  %556 = vst.msk [vmem:[%s4 + $0x2c] sm:$0xf] %vm352, %v472
  %557 = vst.msk [vmem:[%s4 + $0x30] sm:$0xf] %vm352, %v474
  %558 = vst.msk [vmem:[%s4 + $0x34] sm:$0xf] %vm352, %v476
  %559 = vst.msk [vmem:[%s4 + $0x38] sm:$0xf] %vm352, %v478
  %560 = vst.msk [vmem:[%s4 + $0x3c] sm:$0xf] %vm352, %v480
  %561 = vst.msk [vmem:[%s4 + $0x40] sm:$0xf] %vm352, %v482
  %562 = vst.msk [vmem:[%s4 + $0x44] sm:$0xf] %vm352, %v484
  %563 = vst.msk [vmem:[%s4 + $0x48] sm:$0xf] %vm352, %v486
  %564 = vst.msk [vmem:[%s4 + $0x4c] sm:$0xf] %vm352, %v488
  %565 = vst.msk [vmem:[%s4 + $0x50] sm:$0xf] %vm352, %v490
  %566 = vst.msk [vmem:[%s4 + $0x54] sm:$0xf] %vm352, %v492
  %567 = vst.msk [vmem:[%s4 + $0x58] sm:$0xf] %vm352, %v494
  %568 = vst.msk [vmem:[%s4 + $0x5c] sm:$0xf] %vm352, %v496
  %569 = vst.msk [vmem:[%s4 + $0x60] sm:$0xf] %vm352, %v498
  %570 = vst.msk [vmem:[%s4 + $0x64] sm:$0xf] %vm352, %v500
  %571 = vst.msk [vmem:[%s4 + $0x68] sm:$0xf] %vm352, %v502
  %572 = vst.msk [vmem:[%s4 + $0x6c] sm:$0xf] %vm352, %v504
  %573 = vst.msk [vmem:[%s4 + $0x70] sm:$0xf] %vm352, %v506
  %574 = vst.msk [vmem:[%s4 + $0x74] sm:$0xf] %vm352, %v508
  %575 = vst.msk [vmem:[%s4 + $0x78] sm:$0xf] %vm352, %v510
  %576 = vst.msk [vmem:[%s4 + $0x7c] sm:$0xf] %vm352, %v512
  %577 = vrot.lane.b32.xlu0 %v385, 64
  %v578 = vpop.permute.xlu0 %577
  %579 = vrot.lane.b32.xlu0 %v386, 64
  %v580 = vpop.permute.xlu0 %579
  %581 = vrot.lane.b32.xlu0 %v387, 64
  %v582 = vpop.permute.xlu0 %581
  %583 = vrot.lane.b32.xlu0 %v388, 64
  %v584 = vpop.permute.xlu0 %583
  %585 = vrot.lane.b32.xlu0 %v389, 64
  %v586 = vpop.permute.xlu0 %585
  %587 = vrot.lane.b32.xlu0 %v390, 64
  %v588 = vpop.permute.xlu0 %587
  %589 = vrot.lane.b32.xlu0 %v391, 64
  %v590 = vpop.permute.xlu0 %589
  %591 = vrot.lane.b32.xlu0 %v392, 64
  %v592 = vpop.permute.xlu0 %591
  %593 = vrot.lane.b32.xlu0 %v393, 64
  %v594 = vpop.permute.xlu0 %593
  %595 = vrot.lane.b32.xlu0 %v394, 64
  %v596 = vpop.permute.xlu0 %595
  %597 = vrot.lane.b32.xlu0 %v395, 64
  %v598 = vpop.permute.xlu0 %597
  %599 = vrot.lane.b32.xlu0 %v396, 64
  %v600 = vpop.permute.xlu0 %599
  %601 = vrot.lane.b32.xlu0 %v397, 64
  %v602 = vpop.permute.xlu0 %601
  %603 = vrot.lane.b32.xlu0 %v398, 64
  %v604 = vpop.permute.xlu0 %603
  %605 = vrot.lane.b32.xlu0 %v399, 64
  %v606 = vpop.permute.xlu0 %605
  %607 = vrot.lane.b32.xlu0 %v400, 64
  %v608 = vpop.permute.xlu0 %607
  %609 = vrot.lane.b32.xlu0 %v401, 64
  %v610 = vpop.permute.xlu0 %609
  %611 = vrot.lane.b32.xlu0 %v402, 64
  %v612 = vpop.permute.xlu0 %611
  %613 = vrot.lane.b32.xlu0 %v403, 64
  %v614 = vpop.permute.xlu0 %613
  %615 = vrot.lane.b32.xlu0 %v404, 64
  %v616 = vpop.permute.xlu0 %615
  %617 = vrot.lane.b32.xlu0 %v405, 64
  %v618 = vpop.permute.xlu0 %617
  %619 = vrot.lane.b32.xlu0 %v406, 64
  %v620 = vpop.permute.xlu0 %619
  %621 = vrot.lane.b32.xlu0 %v407, 64
  %v622 = vpop.permute.xlu0 %621
  %623 = vrot.lane.b32.xlu0 %v408, 64
  %v624 = vpop.permute.xlu0 %623
  %625 = vrot.lane.b32.xlu0 %v409, 64
  %v626 = vpop.permute.xlu0 %625
  %627 = vrot.lane.b32.xlu0 %v410, 64
  %v628 = vpop.permute.xlu0 %627
  %629 = vrot.lane.b32.xlu0 %v411, 64
  %v630 = vpop.permute.xlu0 %629
  %631 = vrot.lane.b32.xlu0 %v412, 64
  %v632 = vpop.permute.xlu0 %631
  %633 = vrot.lane.b32.xlu0 %v413, 64
  %v634 = vpop.permute.xlu0 %633
  %635 = vrot.lane.b32.xlu0 %v414, 64
  %v636 = vpop.permute.xlu0 %635
  %637 = vrot.lane.b32.xlu0 %v415, 64
  %v638 = vpop.permute.xlu0 %637
  %639 = vrot.lane.b32.xlu0 %v416, 64
  %v640 = vpop.permute.xlu0 %639
  %673 = vst.msk [vmem:[%s5] sm:$0xf] %vm352, %v578
  %674 = vst.msk [vmem:[%s5 + $0x4] sm:$0xf] %vm352, %v580
  %675 = vst.msk [vmem:[%s5 + $0x8] sm:$0xf] %vm352, %v582
  %676 = vst.msk [vmem:[%s5 + $0xc] sm:$0xf] %vm352, %v584
  %677 = vst.msk [vmem:[%s5 + $0x10] sm:$0xf] %vm352, %v586
  %678 = vst.msk [vmem:[%s5 + $0x14] sm:$0xf] %vm352, %v588
  %679 = vst.msk [vmem:[%s5 + $0x18] sm:$0xf] %vm352, %v590
  %680 = vst.msk [vmem:[%s5 + $0x1c] sm:$0xf] %vm352, %v592
  %681 = vst.msk [vmem:[%s5 + $0x20] sm:$0xf] %vm352, %v594
  %682 = vst.msk [vmem:[%s5 + $0x24] sm:$0xf] %vm352, %v596
  %683 = vst.msk [vmem:[%s5 + $0x28] sm:$0xf] %vm352, %v598
  %684 = vst.msk [vmem:[%s5 + $0x2c] sm:$0xf] %vm352, %v600
  %685 = vst.msk [vmem:[%s5 + $0x30] sm:$0xf] %vm352, %v602
  %686 = vst.msk [vmem:[%s5 + $0x34] sm:$0xf] %vm352, %v604
  %687 = vst.msk [vmem:[%s5 + $0x38] sm:$0xf] %vm352, %v606
  %688 = vst.msk [vmem:[%s5 + $0x3c] sm:$0xf] %vm352, %v608
  %689 = vst.msk [vmem:[%s5 + $0x40] sm:$0xf] %vm352, %v610
  %690 = vst.msk [vmem:[%s5 + $0x44] sm:$0xf] %vm352, %v612
  %691 = vst.msk [vmem:[%s5 + $0x48] sm:$0xf] %vm352, %v614
  %692 = vst.msk [vmem:[%s5 + $0x4c] sm:$0xf] %vm352, %v616
  %693 = vst.msk [vmem:[%s5 + $0x50] sm:$0xf] %vm352, %v618
  %694 = vst.msk [vmem:[%s5 + $0x54] sm:$0xf] %vm352, %v620
  %695 = vst.msk [vmem:[%s5 + $0x58] sm:$0xf] %vm352, %v622
  %696 = vst.msk [vmem:[%s5 + $0x5c] sm:$0xf] %vm352, %v624
  %697 = vst.msk [vmem:[%s5 + $0x60] sm:$0xf] %vm352, %v626
  %698 = vst.msk [vmem:[%s5 + $0x64] sm:$0xf] %vm352, %v628
  %699 = vst.msk [vmem:[%s5 + $0x68] sm:$0xf] %vm352, %v630
  %700 = vst.msk [vmem:[%s5 + $0x6c] sm:$0xf] %vm352, %v632
  %701 = vst.msk [vmem:[%s5 + $0x70] sm:$0xf] %vm352, %v634
  %702 = vst.msk [vmem:[%s5 + $0x74] sm:$0xf] %vm352, %v636
  %703 = vst.msk [vmem:[%s5 + $0x78] sm:$0xf] %vm352, %v638
  %704 = vst.msk [vmem:[%s5 + $0x7c] sm:$0xf] %vm352, %v640
  // Predicated region
  $region14: #{tpu_custom_call.1} parent=0 // pred_check
    _
  $region15: #{tpu_custom_call.1} parent=0 // pred_check_branch
    %706 = sbr.rel (0) target = $region17
  $region16: #{tpu_custom_call.1} parent=0 // pred_region
    _
  $region17: #{tpu_custom_call.1} parent=0 // pred_fallthru
    _
  // Predicated region
  $region18: #{tpu_custom_call.1} parent=0 // pred_check
    _
  $region19: #{tpu_custom_call.1} parent=0 // pred_check_branch
    %708 = sbr.rel (0) target = $region21
  $region20: #{tpu_custom_call.1} parent=0 // pred_region
    _
  $region21: #{tpu_custom_call.1} parent=0 // pred_fallthru
    _
  // Predicated region
  $region22: #{tpu_custom_call.1} parent=0 // pred_check
    _
  $region23: #{tpu_custom_call.1} parent=0 // pred_check_branch
    %710 = sbr.rel (0) target = $region25
  $region24: #{tpu_custom_call.1} parent=0 // pred_region
    _
  $region25: #{tpu_custom_call.1} parent=0 // pred_fallthru
    _
  // Predicated region
  $region26: #{tpu_custom_call.1} parent=0 // pred_check
    _
  $region27: #{tpu_custom_call.1} parent=0 // pred_check_branch
    %712 = sbr.rel (0) target = $region29
  $region28: #{tpu_custom_call.1} parent=0 // pred_region
    _
  $region29: #{tpu_custom_call.1} parent=0 // pred_fallthru
    _
  // Predicated region
  $region30: #{tpu_custom_call.1} parent=0 // pred_check
    _
  $region31: #{tpu_custom_call.1} parent=0 // pred_check_branch
    %714 = sbr.rel (0) target = $region33
  $region32: #{tpu_custom_call.1} parent=0 // pred_region
    _
  $region33: #{tpu_custom_call.1} parent=0 // pred_fallthru
    _
  // Predicated region
  $region34: #{tpu_custom_call.1} parent=0 // pred_check
    _
  $region35: #{tpu_custom_call.1} parent=0 // pred_check_branch
    %716 = sbr.rel (0) target = $region37
  $region36: #{tpu_custom_call.1} parent=0 // pred_region
    _
  $region37: #{tpu_custom_call.1} parent=0 // pred_fallthru
    _

</llo_original>
